<compile_context>
chip_gen: v6e
topology: v6e:2x2x1
jax: 0.10.0
libtpu: 0.0.40
codegen_flags: <defaults>
</compile_context>

<pallas_src>
import functools

import jax
import jax.numpy as jnp
from jax import lax
from jax.experimental import pallas as pl
from jax.experimental.pallas import tpu as pltpu

# ---- synthetic small BERT config (stands in for bert.config) ----
VOCAB = 100
HIDDEN = 32
N_LAYERS = 2
N_HEADS = 2
HEAD_DIM = HIDDEN // N_HEADS
INTERMEDIATE = 64
MAX_POS = 16
N_OUTPUTS = 5
LN_EPS = 1e-12


# ----------------------------- fused Pallas kernel -----------------------------

def _ln(x, g, b, eps=LN_EPS):
    mu = jnp.mean(x, axis=-1, keepdims=True)
    xc = x - mu
    var = jnp.mean(xc * xc, axis=-1, keepdims=True)
    return xc * lax.rsqrt(var + eps) * g + b


def _softmax_rows(s):
    s = s - jnp.max(s, axis=-1, keepdims=True)
    p = jnp.exp(s)
    return p * pl.reciprocal(jnp.sum(p, axis=-1, keepdims=True), approx=True)


def _bert_fused_kernel(B, S,
                       x_ref, mask_ref, emb_g_ref, emb_b_ref,
                       wqkv_ref, bqkv_ref, wo_ref, bo_ref,
                       ln1_g_ref, ln1_b_ref,
                       w1_ref, b1_ref, w2_ref, b2_ref,
                       ln2_g_ref, ln2_b_ref,
                       pool_w_ref, pool_b_ref, reg_w_ref, reg_b_ref,
                       o_ref, x_sc):
    """One encoder layer per grid step; activations resident in x_sc (VMEM)."""
    l = pl.program_id(0)
    scale = 1.0 / (HEAD_DIM ** 0.5)

    @pl.when(l == 0)
    def _():
        # Embedding LayerNorm -> resident activations.
        x_sc[...] = _ln(x_ref[...], emb_g_ref[...], emb_b_ref[...])

    x = x_sc[...]                                               # (B*S, H)

    # ---- self-attention: single fused QKV matmul, heads sliced in-kernel ----
    qkv = jnp.dot(x, wqkv_ref[0],
                  preferred_element_type=jnp.float32) + bqkv_ref[0]  # (B*S, 3H)
    bias = (1.0 - mask_ref[...]) * -1e9                         # (B, S) additive mask
    bias3 = bias[:, None, :]                                    # (B, 1, S)

    ctx_heads = []
    for h in range(N_HEADS):                                    # static, small unroll
        q = qkv[:, h * HEAD_DIM:(h + 1) * HEAD_DIM].reshape(B, S, HEAD_DIM)
        k = qkv[:, HIDDEN + h * HEAD_DIM:
                   HIDDEN + (h + 1) * HEAD_DIM].reshape(B, S, HEAD_DIM)
        v = qkv[:, 2 * HIDDEN + h * HEAD_DIM:
                   2 * HIDDEN + (h + 1) * HEAD_DIM].reshape(B, S, HEAD_DIM)
        s = jnp.einsum("bqd,bkd->bqk", q, k,
                       preferred_element_type=jnp.float32) * scale + bias3
        p = _softmax_rows(s)
        ctx_heads.append(jnp.einsum("bqk,bkd->bqd", p, v,
                                    preferred_element_type=jnp.float32))
    ctx = jnp.concatenate(ctx_heads, axis=-1).reshape(B * S, HIDDEN)

    attn_out = jnp.dot(ctx, wo_ref[0],
                       preferred_element_type=jnp.float32) + bo_ref[0]
    x = _ln(attn_out + x, ln1_g_ref[0], ln1_b_ref[0])

    # ---- feed-forward ----
    # TODO(synk): HF BERT uses exact erf-GELU; tanh approximation used here
    # (reference below uses the same approximation).
    h = jax.nn.gelu(jnp.dot(x, w1_ref[0], preferred_element_type=jnp.float32)
                    + b1_ref[0], approximate=True)
    ffn = jnp.dot(h, w2_ref[0], preferred_element_type=jnp.float32) + b2_ref[0]
    x = _ln(ffn + x, ln2_g_ref[0], ln2_b_ref[0])
    x_sc[...] = x

    # ---- pooler + regressor head: only the final (B, N_OUTPUTS) hits HBM ----
    @pl.when(l == pl.num_programs(0) - 1)
    def _():
        cls = jnp.concatenate([x[b * S:b * S + 1, :] for b in range(B)], axis=0)  # (B, H)
        pooled = jnp.tanh(jnp.dot(cls, pool_w_ref[...],
                                  preferred_element_type=jnp.float32)
                          + pool_b_ref[...])
        o_ref[...] = (jnp.dot(pooled, reg_w_ref[...],
                              preferred_element_type=jnp.float32)
                      + reg_b_ref[...]).astype(o_ref.dtype)


def bert_regressor_forward(params, input_ids, attention_mask):
    B, S = input_ids.shape

    # Embeddings (glue: table gathers). token_type hardcoded to 0.
    x = (params["word_emb"][input_ids]
         + params["pos_emb"][jnp.arange(S)][None, :, :]
         + params["type_emb"][0][None, None, :]).reshape(B * S, HIDDEN)
    mask = attention_mask.astype(jnp.float32)

    def layer_spec(shp):                      # stacked (N_LAYERS, ...) weights
        return pl.BlockSpec((1,) + shp, lambda l: (l,) + (0,) * len(shp))

    def const_spec(shp):                      # layer-invariant arrays
        return pl.BlockSpec(shp, lambda l: (0,) * len(shp))

    return pl.pallas_call(
        functools.partial(_bert_fused_kernel, B, S),
        out_shape=jax.ShapeDtypeStruct((B, N_OUTPUTS), jnp.float32),
        grid=(N_LAYERS,),
        in_specs=[
            const_spec((B * S, HIDDEN)),        # embedded tokens
            const_spec((B, S)),                 # attention mask
            const_spec((1, HIDDEN)),            # emb_ln_g
            const_spec((1, HIDDEN)),            # emb_ln_b
            layer_spec((HIDDEN, 3 * HIDDEN)),   # wqkv
            layer_spec((1, 3 * HIDDEN)),        # bqkv
            layer_spec((HIDDEN, HIDDEN)),       # wo
            layer_spec((1, HIDDEN)),            # bo
            layer_spec((1, HIDDEN)),            # ln1_g
            layer_spec((1, HIDDEN)),            # ln1_b
            layer_spec((HIDDEN, INTERMEDIATE)), # w1
            layer_spec((1, INTERMEDIATE)),      # b1
            layer_spec((INTERMEDIATE, HIDDEN)), # w2
            layer_spec((1, HIDDEN)),            # b2
            layer_spec((1, HIDDEN)),            # ln2_g
            layer_spec((1, HIDDEN)),            # ln2_b
            const_spec((HIDDEN, HIDDEN)),       # pool_w
            const_spec((1, HIDDEN)),            # pool_b
            const_spec((HIDDEN, N_OUTPUTS)),    # reg_w
            const_spec((1, N_OUTPUTS)),         # reg_b
        ],
        out_specs=pl.BlockSpec((B, N_OUTPUTS), lambda l: (0, 0)),
        scratch_shapes=[pltpu.VMEM((B * S, HIDDEN), jnp.float32)],
        compiler_params=pltpu.CompilerParams(
            dimension_semantics=("arbitrary",)),   # layer axis carries state
    )(x, mask,
      params["emb_ln_g"], params["emb_ln_b"],
      params["wqkv"], params["bqkv"], params["wo"], params["bo"],
      params["ln1_g"], params["ln1_b"],
      params["w1"], params["b1"], params["w2"], params["b2"],
      params["ln2_g"], params["ln2_b"],
      params["pool_w"], params["pool_b"], params["reg_w"], params["reg_b"])


# ----------------------------- parameter init -----------------------------

def init_params(key):
    keys = iter(jax.random.split(key, 64))

    def dense(k, fan_in, fan_out):
        return jax.random.normal(k, (fan_in, fan_out), jnp.float32) * 0.02

    p = {
        "word_emb": jax.random.normal(next(keys), (VOCAB, HIDDEN), jnp.float32) * 0.02,
        "pos_emb": jax.random.normal(next(keys), (MAX_POS, HIDDEN), jnp.float32) * 0.02,
        "type_emb": jax.random.normal(next(keys), (2, HIDDEN), jnp.float32) * 0.02,
        "emb_ln_g": jnp.ones((1, HIDDEN), jnp.float32),
        "emb_ln_b": jnp.zeros((1, HIDDEN), jnp.float32),
    }
    wqkv, wo, w1, w2 = [], [], [], []
    for _ in range(N_LAYERS):
        wq = dense(next(keys), HIDDEN, HIDDEN)
        wk = dense(next(keys), HIDDEN, HIDDEN)
        wv = dense(next(keys), HIDDEN, HIDDEN)
        wqkv.append(jnp.concatenate([wq, wk, wv], axis=1))      # fused QKV weight
        wo.append(dense(next(keys), HIDDEN, HIDDEN))
        w1.append(dense(next(keys), HIDDEN, INTERMEDIATE))
        w2.append(dense(next(keys), INTERMEDIATE, HIDDEN))
    p["wqkv"] = jnp.stack(wqkv)                                  # (L, H, 3H)
    p["bqkv"] = jnp.zeros((N_LAYERS, 1, 3 * HIDDEN), jnp.float32)
    p["wo"] = jnp.stack(wo)
    p["bo"] = jnp.zeros((N_LAYERS, 1, HIDDEN), jnp.float32)
    p["ln1_g"] = jnp.ones((N_LAYERS, 1, HIDDEN), jnp.float32)
    p["ln1_b"] = jnp.zeros((N_LAYERS, 1, HIDDEN), jnp.float32)
    p["w1"] = jnp.stack(w1)
    p["b1"] = jnp.zeros((N_LAYERS, 1, INTERMEDIATE), jnp.float32)
    p["w2"] = jnp.stack(w2)
    p["b2"] = jnp.zeros((N_LAYERS, 1, HIDDEN), jnp.float32)
    p["ln2_g"] = jnp.ones((N_LAYERS, 1, HIDDEN), jnp.float32)
    p["ln2_b"] = jnp.zeros((N_LAYERS, 1, HIDDEN), jnp.float32)
    p["pool_w"] = dense(next(keys), HIDDEN, HIDDEN)
    p["pool_b"] = jnp.zeros((1, HIDDEN), jnp.float32)
    p["reg_w"] = dense(next(keys), HIDDEN, N_OUTPUTS)
    p["reg_b"] = jnp.zeros((1, N_OUTPUTS), jnp.float32)
    return p


# ----------------------------- plain-JAX reference -----------------------------

def _reference_forward(params, input_ids, attention_mask):
    B, S = input_ids.shape
    x = (params["word_emb"][input_ids]
         + params["pos_emb"][jnp.arange(S)][None, :, :]
         + params["type_emb"][0][None, None, :]).reshape(B * S, HIDDEN)

    def ln(x, g, b):
        mu = jnp.mean(x, axis=-1, keepdims=True)
        var = jnp.mean((x - mu) ** 2, axis=-1, keepdims=True)
        return (x - mu) / jnp.sqrt(var + LN_EPS) * g + b

    x = ln(x, params["emb_ln_g"], params["emb_ln_b"])
    bias = (1.0 - attention_mask.astype(jnp.float32)) * -1e9
    scale = 1.0 / (HEAD_DIM ** 0.5)
    for l in range(N_LAYERS):
        qkv = x @ params["wqkv"][l] + params["bqkv"][l]
        q, k, v = jnp.split(qkv, 3, axis=-1)

        def heads(t):
            return t.reshape(B, S, N_HEADS, HEAD_DIM).transpose(0, 2, 1, 3)

        q, k, v = heads(q), heads(k), heads(v)
        s = jnp.einsum("bhqd,bhkd->bhqk", q, k) * scale + bias[:, None, None, :]
        p = jax.nn.softmax(s, axis=-1)
        ctx = (jnp.einsum("bhqk,bhkd->bhqd", p, v)
               .transpose(0, 2, 1, 3).reshape(B * S, HIDDEN))
        x = ln(ctx @ params["wo"][l] + params["bo"][l] + x,
               params["ln1_g"][l], params["ln1_b"][l])
        h = jax.nn.gelu(x @ params["w1"][l] + params["b1"][l], approximate=True)
        x = ln(h @ params["w2"][l] + params["b2"][l] + x,
               params["ln2_g"][l], params["ln2_b"][l])
    cls = x.reshape(B, S, HIDDEN)[:, 0, :]
    pooled = jnp.tanh(cls @ params["pool_w"] + params["pool_b"])
    return pooled @ params["reg_w"] + params["reg_b"]


# --------------------------------- main -----------------------------------

if __name__ == "__main__":
    B, S = 2, 8
    key = jax.random.PRNGKey(0)
    k_param, k_ids = jax.random.split(key)

    params = init_params(k_param)
    input_ids = jax.random.randint(k_ids, (B, S), 0, VOCAB, dtype=jnp.int32)
    # Mask out the last two tokens of the second sequence (padding).
    attention_mask = jnp.ones((B, S), jnp.int32).at[1, -2:].set(0)

    fwd = jax.jit(functools.partial(bert_regressor_forward, params))
    preds = fwd(input_ids, attention_mask)
    jax.block_until_ready(preds)

    ref = _reference_forward(params, input_ids, attention_mask)
    assert preds.shape == (B, N_OUTPUTS) and preds.dtype == jnp.float32
    assert jnp.allclose(preds, ref, atol=5e-3, rtol=5e-3), (preds, ref)
    print("KERNEL_OK")
</pallas_src>

<mosaic_0001>
module attributes {stable_mosaic.version = 11 : i64} {
  func.func @_bert_fused_kernel(%arg0: i32, %arg1: memref<16x32xf32, #tpu.memory_space<vmem>>, %arg2: memref<2x8xf32, #tpu.memory_space<vmem>>, %arg3: memref<1x32xf32, #tpu.memory_space<vmem>>, %arg4: memref<1x32xf32, #tpu.memory_space<vmem>>, %arg5: memref<1x32x96xf32, #tpu.memory_space<vmem>>, %arg6: memref<1x1x96xf32, #tpu.memory_space<vmem>>, %arg7: memref<1x32x32xf32, #tpu.memory_space<vmem>>, %arg8: memref<1x1x32xf32, #tpu.memory_space<vmem>>, %arg9: memref<1x1x32xf32, #tpu.memory_space<vmem>>, %arg10: memref<1x1x32xf32, #tpu.memory_space<vmem>>, %arg11: memref<1x32x64xf32, #tpu.memory_space<vmem>>, %arg12: memref<1x1x64xf32, #tpu.memory_space<vmem>>, %arg13: memref<1x64x32xf32, #tpu.memory_space<vmem>>, %arg14: memref<1x1x32xf32, #tpu.memory_space<vmem>>, %arg15: memref<1x1x32xf32, #tpu.memory_space<vmem>>, %arg16: memref<1x1x32xf32, #tpu.memory_space<vmem>>, %arg17: memref<32x32xf32, #tpu.memory_space<vmem>>, %arg18: memref<1x32xf32, #tpu.memory_space<vmem>>, %arg19: memref<32x5xf32, #tpu.memory_space<vmem>>, %arg20: memref<1x5xf32, #tpu.memory_space<vmem>>, %arg21: memref<2x5xf32, #tpu.memory_space<vmem>>, %arg22: memref<16x32xf32, #tpu.memory_space<vmem>>) attributes {dimension_semantics = [#tpu.dimension_semantics<arbitrary>], iteration_bounds = array<i64: 2>, scalar_prefetch = 0 : i64, scratch_operands = 1 : i64, tpu.core_type = #tpu.core_type<tc>, window_params = [{pipeline_mode = #tpu.pipeline_mode<synchronous>, transform_indices = @transform_0, window_bounds = array<i64: 16, 32>}, {pipeline_mode = #tpu.pipeline_mode<synchronous>, transform_indices = @transform_1, window_bounds = array<i64: 2, 8>}, {pipeline_mode = #tpu.pipeline_mode<synchronous>, transform_indices = @transform_2, window_bounds = array<i64: 1, 32>}, {pipeline_mode = #tpu.pipeline_mode<synchronous>, transform_indices = @transform_3, window_bounds = array<i64: 1, 32>}, {transform_indices = @transform_4, window_bounds = array<i64: 1, 32, 96>}, {transform_indices = @transform_5, window_bounds = array<i64: 1, 1, 96>}, {transform_indices = @transform_6, window_bounds = array<i64: 1, 32, 32>}, {transform_indices = @transform_7, window_bounds = array<i64: 1, 1, 32>}, {transform_indices = @transform_8, window_bounds = array<i64: 1, 1, 32>}, {transform_indices = @transform_9, window_bounds = array<i64: 1, 1, 32>}, {transform_indices = @transform_10, window_bounds = array<i64: 1, 32, 64>}, {transform_indices = @transform_11, window_bounds = array<i64: 1, 1, 64>}, {transform_indices = @transform_12, window_bounds = array<i64: 1, 64, 32>}, {transform_indices = @transform_13, window_bounds = array<i64: 1, 1, 32>}, {transform_indices = @transform_14, window_bounds = array<i64: 1, 1, 32>}, {transform_indices = @transform_15, window_bounds = array<i64: 1, 1, 32>}, {pipeline_mode = #tpu.pipeline_mode<synchronous>, transform_indices = @transform_16, window_bounds = array<i64: 32, 32>}, {pipeline_mode = #tpu.pipeline_mode<synchronous>, transform_indices = @transform_17, window_bounds = array<i64: 1, 32>}, {pipeline_mode = #tpu.pipeline_mode<synchronous>, transform_indices = @transform_18, window_bounds = array<i64: 32, 5>}, {pipeline_mode = #tpu.pipeline_mode<synchronous>, transform_indices = @transform_19, window_bounds = array<i64: 1, 5>}, {pipeline_mode = #tpu.pipeline_mode<synchronous>, transform_indices = @transform_20, window_bounds = array<i64: 2, 5>}]} {
    %c0_i32 = arith.constant 0 : i32
    %0 = arith.cmpi eq, %arg0, %c0_i32 : i32
    %1 = arith.extui %0 : i1 to i32
    %c0_i32_0 = arith.constant 0 : i32
    %2 = arith.cmpi ne, %1, %c0_i32_0 : i32
    scf.if %2 {
      %c0_72 = arith.constant 0 : index
      %c0_73 = arith.constant 0 : index
      %151 = vector.load %arg1[%c0_72, %c0_73] : memref<16x32xf32, #tpu.memory_space<vmem>>, vector<16x32xf32>
      %c0_74 = arith.constant 0 : index
      %c0_75 = arith.constant 0 : index
      %152 = vector.load %arg3[%c0_74, %c0_75] : memref<1x32xf32, #tpu.memory_space<vmem>>, vector<1x32xf32>
      %c0_76 = arith.constant 0 : index
      %c0_77 = arith.constant 0 : index
      %153 = vector.load %arg4[%c0_76, %c0_77] : memref<1x32xf32, #tpu.memory_space<vmem>>, vector<1x32xf32>
      %cst_78 = arith.constant dense<0.000000e+00> : vector<16xf32>
      %154 = vector.multi_reduction <add>, %151, %cst_78 [1] : vector<16x32xf32> to vector<16xf32>
      %155 = vector.shape_cast %154 : vector<16xf32> to vector<16x1xf32>
      %cst_79 = arith.constant 3.200000e+01 : f32
      %156 = vector.broadcast %cst_79 : f32 to vector<16x1xf32>
      %157 = arith.divf %155, %156 : vector<16x1xf32>
      %158 = vector.broadcast %157 : vector<16x1xf32> to vector<16x32xf32>
      %159 = arith.subf %151, %158 : vector<16x32xf32>
      %160 = arith.mulf %159, %159 : vector<16x32xf32>
      %cst_80 = arith.constant dense<0.000000e+00> : vector<16xf32>
      %161 = vector.multi_reduction <add>, %160, %cst_80 [1] : vector<16x32xf32> to vector<16xf32>
      %162 = vector.shape_cast %161 : vector<16xf32> to vector<16x1xf32>
      %cst_81 = arith.constant 3.200000e+01 : f32
      %163 = vector.broadcast %cst_81 : f32 to vector<16x1xf32>
      %164 = arith.divf %162, %163 : vector<16x1xf32>
      %cst_82 = arith.constant 9.99999996E-13 : f32
      %165 = vector.broadcast %cst_82 : f32 to vector<16x1xf32>
      %166 = arith.addf %164, %165 : vector<16x1xf32>
      %167 = math.rsqrt %166 : vector<16x1xf32>
      %168 = vector.broadcast %167 : vector<16x1xf32> to vector<16x32xf32>
      %169 = arith.mulf %159, %168 : vector<16x32xf32>
      %170 = vector.broadcast %152 : vector<1x32xf32> to vector<16x32xf32>
      %171 = arith.mulf %169, %170 : vector<16x32xf32>
      %172 = vector.broadcast %153 : vector<1x32xf32> to vector<16x32xf32>
      %173 = arith.addf %171, %172 : vector<16x32xf32>
      %c0_83 = arith.constant 0 : index
      %c0_84 = arith.constant 0 : index
      %174 = vector.load %arg22[%c0_83, %c0_84] : memref<16x32xf32, #tpu.memory_space<vmem>>, vector<16x32xf32>
      tpu.vector_store %arg22[%c0_83, %c0_84], %173 {strides = array<i32>} : memref<16x32xf32, #tpu.memory_space<vmem>>, vector<16x32xf32>,
    } else {
    }
    %c0 = arith.constant 0 : index
    %c0_1 = arith.constant 0 : index
    %3 = vector.load %arg22[%c0, %c0_1] : memref<16x32xf32, #tpu.memory_space<vmem>>, vector<16x32xf32>
    %c0_2 = arith.constant 0 : index
    %c0_3 = arith.constant 0 : index
    %c0_4 = arith.constant 0 : index
    %4 = vector.load %arg5[%c0_2, %c0_3, %c0_4] : memref<1x32x96xf32, #tpu.memory_space<vmem>>, vector<1x32x96xf32>
    %5 = vector.shape_cast %4 : vector<1x32x96xf32> to vector<32x96xf32>
    %cst = arith.constant dense<0.000000e+00> : vector<16x96xf32>
    %6 = tpu.matmul %3, %5, %cst {dimension_numbers = #tpu.dot_dimension_numbers<[1], [0], [0], [1], [0, 0, 1, 1], [], []>} : vector<16x32xf32>, vector<32x96xf32>, vector<16x96xf32> -> vector<16x96xf32>
    %c0_5 = arith.constant 0 : index
    %c0_6 = arith.constant 0 : index
    %c0_7 = arith.constant 0 : index
    %7 = vector.load %arg6[%c0_5, %c0_6, %c0_7] : memref<1x1x96xf32, #tpu.memory_space<vmem>>, vector<1x1x96xf32>
    %8 = vector.shape_cast %7 : vector<1x1x96xf32> to vector<1x96xf32>
    %9 = vector.broadcast %8 : vector<1x96xf32> to vector<16x96xf32>
    %10 = arith.addf %6, %9 : vector<16x96xf32>
    %c0_8 = arith.constant 0 : index
    %c0_9 = arith.constant 0 : index
    %11 = vector.load %arg2[%c0_8, %c0_9] : memref<2x8xf32, #tpu.memory_space<vmem>>, vector<2x8xf32>
    %cst_10 = arith.constant 1.000000e+00 : f32
    %12 = vector.broadcast %cst_10 : f32 to vector<2x8xf32>
    %13 = arith.subf %12, %11 : vector<2x8xf32>
    %cst_11 = arith.constant -1.000000e+09 : f32
    %14 = vector.broadcast %cst_11 : f32 to vector<2x8xf32>
    %15 = arith.mulf %13, %14 : vector<2x8xf32>
    %16 = vector.shape_cast %15 : vector<2x8xf32> to vector<2x1x8xf32>
    %17 = vector.extract_strided_slice %10 {offsets = [0, 0], sizes = [16, 16], strides = [1, 1]} : vector<16x96xf32> to vector<16x16xf32>
    %18 = vector.shape_cast %17 : vector<16x16xf32> to vector<2x8x16xf32>
    %19 = vector.extract_strided_slice %10 {offsets = [0, 32], sizes = [16, 16], strides = [1, 1]} : vector<16x96xf32> to vector<16x16xf32>
    %20 = vector.shape_cast %19 : vector<16x16xf32> to vector<2x8x16xf32>
    %21 = vector.extract_strided_slice %10 {offsets = [0, 64], sizes = [16, 16], strides = [1, 1]} : vector<16x96xf32> to vector<16x16xf32>
    %22 = vector.shape_cast %21 : vector<16x16xf32> to vector<2x8x16xf32>
    "tpu.trace_start"() <{level = 10 : i32, message = "bqd,bkd->bqk"}> : () -> ()
    %cst_12 = arith.constant dense<0.000000e+00> : vector<2x8x8xf32>
    %23 = tpu.matmul %18, %20, %cst_12 {dimension_numbers = #tpu.dot_dimension_numbers<[2], [2], [1], [1], [0, 0, 0, 1, 1, 1], [0], [0]>} : vector<2x8x16xf32>, vector<2x8x16xf32>, vector<2x8x8xf32> -> vector<2x8x8xf32>
    "tpu.trace_stop"() : () -> ()
    %cst_13 = arith.constant 2.500000e-01 : f32
    %24 = vector.broadcast %cst_13 : f32 to vector<2x8x8xf32>
    %25 = arith.mulf %23, %24 : vector<2x8x8xf32>
    %26 = vector.broadcast %16 : vector<2x1x8xf32> to vector<2x8x8xf32>
    %27 = arith.addf %25, %26 : vector<2x8x8xf32>
    %cst_14 = arith.constant dense<0xFF800000> : vector<2x8xf32>
    %28 = vector.multi_reduction <maximumf>, %27, %cst_14 [2] : vector<2x8x8xf32> to vector<2x8xf32>
    %29 = vector.shape_cast %28 : vector<2x8xf32> to vector<2x8x1xf32>
    %30 = vector.broadcast %29 : vector<2x8x1xf32> to vector<2x8x8xf32>
    %31 = arith.subf %27, %30 : vector<2x8x8xf32>
    %32 = math.exp %31 : vector<2x8x8xf32>
    %cst_15 = arith.constant dense<0.000000e+00> : vector<2x8xf32>
    %33 = vector.multi_reduction <add>, %32, %cst_15 [2] : vector<2x8x8xf32> to vector<2x8xf32>
    %34 = vector.shape_cast %33 : vector<2x8xf32> to vector<2x8x1xf32>
    %35 = tpu.reciprocal %34 {approx = true} : vector<2x8x1xf32> -> vector<2x8x1xf32>
    %36 = vector.broadcast %35 : vector<2x8x1xf32> to vector<2x8x8xf32>
    %37 = arith.mulf %32, %36 : vector<2x8x8xf32>
    "tpu.trace_start"() <{level = 10 : i32, message = "bqk,bkd->bqd"}> : () -> ()
    %cst_16 = arith.constant dense<0.000000e+00> : vector<2x8x16xf32>
    %38 = tpu.matmul %37, %22, %cst_16 {dimension_numbers = #tpu.dot_dimension_numbers<[2], [1], [1], [2], [0, 0, 0, 1, 1, 2], [0], [0]>} : vector<2x8x8xf32>, vector<2x8x16xf32>, vector<2x8x16xf32> -> vector<2x8x16xf32>
    "tpu.trace_stop"() : () -> ()
    %39 = vector.extract_strided_slice %10 {offsets = [0, 16], sizes = [16, 16], strides = [1, 1]} : vector<16x96xf32> to vector<16x16xf32>
    %40 = vector.shape_cast %39 : vector<16x16xf32> to vector<2x8x16xf32>
    %41 = vector.extract_strided_slice %10 {offsets = [0, 48], sizes = [16, 16], strides = [1, 1]} : vector<16x96xf32> to vector<16x16xf32>
    %42 = vector.shape_cast %41 : vector<16x16xf32> to vector<2x8x16xf32>
    %43 = vector.extract_strided_slice %10 {offsets = [0, 80], sizes = [16, 16], strides = [1, 1]} : vector<16x96xf32> to vector<16x16xf32>
    %44 = vector.shape_cast %43 : vector<16x16xf32> to vector<2x8x16xf32>
    "tpu.trace_start"() <{level = 10 : i32, message = "bqd,bkd->bqk"}> : () -> ()
    %cst_17 = arith.constant dense<0.000000e+00> : vector<2x8x8xf32>
    %45 = tpu.matmul %40, %42, %cst_17 {dimension_numbers = #tpu.dot_dimension_numbers<[2], [2], [1], [1], [0, 0, 0, 1, 1, 1], [0], [0]>} : vector<2x8x16xf32>, vector<2x8x16xf32>, vector<2x8x8xf32> -> vector<2x8x8xf32>
    "tpu.trace_stop"() : () -> ()
    %cst_18 = arith.constant 2.500000e-01 : f32
    %46 = vector.broadcast %cst_18 : f32 to vector<2x8x8xf32>
    %47 = arith.mulf %45, %46 : vector<2x8x8xf32>
    %48 = vector.broadcast %16 : vector<2x1x8xf32> to vector<2x8x8xf32>
    %49 = arith.addf %47, %48 : vector<2x8x8xf32>
    %cst_19 = arith.constant dense<0xFF800000> : vector<2x8xf32>
    %50 = vector.multi_reduction <maximumf>, %49, %cst_19 [2] : vector<2x8x8xf32> to vector<2x8xf32>
    %51 = vector.shape_cast %50 : vector<2x8xf32> to vector<2x8x1xf32>
    %52 = vector.broadcast %51 : vector<2x8x1xf32> to vector<2x8x8xf32>
    %53 = arith.subf %49, %52 : vector<2x8x8xf32>
    %54 = math.exp %53 : vector<2x8x8xf32>
    %cst_20 = arith.constant dense<0.000000e+00> : vector<2x8xf32>
    %55 = vector.multi_reduction <add>, %54, %cst_20 [2] : vector<2x8x8xf32> to vector<2x8xf32>
    %56 = vector.shape_cast %55 : vector<2x8xf32> to vector<2x8x1xf32>
    %57 = tpu.reciprocal %56 {approx = true} : vector<2x8x1xf32> -> vector<2x8x1xf32>
    %58 = vector.broadcast %57 : vector<2x8x1xf32> to vector<2x8x8xf32>
    %59 = arith.mulf %54, %58 : vector<2x8x8xf32>
    "tpu.trace_start"() <{level = 10 : i32, message = "bqk,bkd->bqd"}> : () -> ()
    %cst_21 = arith.constant dense<0.000000e+00> : vector<2x8x16xf32>
    %60 = tpu.matmul %59, %44, %cst_21 {dimension_numbers = #tpu.dot_dimension_numbers<[2], [1], [1], [2], [0, 0, 0, 1, 1, 2], [0], [0]>} : vector<2x8x8xf32>, vector<2x8x16xf32>, vector<2x8x16xf32> -> vector<2x8x16xf32>
    "tpu.trace_stop"() : () -> ()
    %61 = tpu.concatenate %38, %60 in 2 : vector<2x8x16xf32>, vector<2x8x16xf32> -> vector<2x8x32xf32>
    %62 = vector.shape_cast %61 : vector<2x8x32xf32> to vector<16x32xf32>
    %c0_22 = arith.constant 0 : index
    %c0_23 = arith.constant 0 : index
    %c0_24 = arith.constant 0 : index
    %63 = vector.load %arg7[%c0_22, %c0_23, %c0_24] : memref<1x32x32xf32, #tpu.memory_space<vmem>>, vector<1x32x32xf32>
    %64 = vector.shape_cast %63 : vector<1x32x32xf32> to vector<32x32xf32>
    %cst_25 = arith.constant dense<0.000000e+00> : vector<16x32xf32>
    %65 = tpu.matmul %62, %64, %cst_25 {dimension_numbers = #tpu.dot_dimension_numbers<[1], [0], [0], [1], [0, 0, 1, 1], [], []>} : vector<16x32xf32>, vector<32x32xf32>, vector<16x32xf32> -> vector<16x32xf32>
    %c0_26 = arith.constant 0 : index
    %c0_27 = arith.constant 0 : index
    %c0_28 = arith.constant 0 : index
    %66 = vector.load %arg8[%c0_26, %c0_27, %c0_28] : memref<1x1x32xf32, #tpu.memory_space<vmem>>, vector<1x1x32xf32>
    %67 = vector.shape_cast %66 : vector<1x1x32xf32> to vector<1x32xf32>
    %68 = vector.broadcast %67 : vector<1x32xf32> to vector<16x32xf32>
    %69 = arith.addf %65, %68 : vector<16x32xf32>
    %70 = arith.addf %69, %3 : vector<16x32xf32>
    %c0_29 = arith.constant 0 : index
    %c0_30 = arith.constant 0 : index
    %c0_31 = arith.constant 0 : index
    %71 = vector.load %arg9[%c0_29, %c0_30, %c0_31] : memref<1x1x32xf32, #tpu.memory_space<vmem>>, vector<1x1x32xf32>
    %72 = vector.shape_cast %71 : vector<1x1x32xf32> to vector<1x32xf32>
    %c0_32 = arith.constant 0 : index
    %c0_33 = arith.constant 0 : index
    %c0_34 = arith.constant 0 : index
    %73 = vector.load %arg10[%c0_32, %c0_33, %c0_34] : memref<1x1x32xf32, #tpu.memory_space<vmem>>, vector<1x1x32xf32>
    %74 = vector.shape_cast %73 : vector<1x1x32xf32> to vector<1x32xf32>
    %cst_35 = arith.constant dense<0.000000e+00> : vector<16xf32>
    %75 = vector.multi_reduction <add>, %70, %cst_35 [1] : vector<16x32xf32> to vector<16xf32>
    %76 = vector.shape_cast %75 : vector<16xf32> to vector<16x1xf32>
    %cst_36 = arith.constant 3.200000e+01 : f32
    %77 = vector.broadcast %cst_36 : f32 to vector<16x1xf32>
    %78 = arith.divf %76, %77 : vector<16x1xf32>
    %79 = vector.broadcast %78 : vector<16x1xf32> to vector<16x32xf32>
    %80 = arith.subf %70, %79 : vector<16x32xf32>
    %81 = arith.mulf %80, %80 : vector<16x32xf32>
    %cst_37 = arith.constant dense<0.000000e+00> : vector<16xf32>
    %82 = vector.multi_reduction <add>, %81, %cst_37 [1] : vector<16x32xf32> to vector<16xf32>
    %83 = vector.shape_cast %82 : vector<16xf32> to vector<16x1xf32>
    %cst_38 = arith.constant 3.200000e+01 : f32
    %84 = vector.broadcast %cst_38 : f32 to vector<16x1xf32>
    %85 = arith.divf %83, %84 : vector<16x1xf32>
    %cst_39 = arith.constant 9.99999996E-13 : f32
    %86 = vector.broadcast %cst_39 : f32 to vector<16x1xf32>
    %87 = arith.addf %85, %86 : vector<16x1xf32>
    %88 = math.rsqrt %87 : vector<16x1xf32>
    %89 = vector.broadcast %88 : vector<16x1xf32> to vector<16x32xf32>
    %90 = arith.mulf %80, %89 : vector<16x32xf32>
    %91 = vector.broadcast %72 : vector<1x32xf32> to vector<16x32xf32>
    %92 = arith.mulf %90, %91 : vector<16x32xf32>
    %93 = vector.broadcast %74 : vector<1x32xf32> to vector<16x32xf32>
    %94 = arith.addf %92, %93 : vector<16x32xf32>
    %c0_40 = arith.constant 0 : index
    %c0_41 = arith.constant 0 : index
    %c0_42 = arith.constant 0 : index
    %95 = vector.load %arg11[%c0_40, %c0_41, %c0_42] : memref<1x32x64xf32, #tpu.memory_space<vmem>>, vector<1x32x64xf32>
    %96 = vector.shape_cast %95 : vector<1x32x64xf32> to vector<32x64xf32>
    %cst_43 = arith.constant dense<0.000000e+00> : vector<16x64xf32>
    %97 = tpu.matmul %94, %96, %cst_43 {dimension_numbers = #tpu.dot_dimension_numbers<[1], [0], [0], [1], [0, 0, 1, 1], [], []>} : vector<16x32xf32>, vector<32x64xf32>, vector<16x64xf32> -> vector<16x64xf32>
    %c0_44 = arith.constant 0 : index
    %c0_45 = arith.constant 0 : index
    %c0_46 = arith.constant 0 : index
    %98 = vector.load %arg12[%c0_44, %c0_45, %c0_46] : memref<1x1x64xf32, #tpu.memory_space<vmem>>, vector<1x1x64xf32>
    %99 = vector.shape_cast %98 : vector<1x1x64xf32> to vector<1x64xf32>
    %100 = vector.broadcast %99 : vector<1x64xf32> to vector<16x64xf32>
    %101 = arith.addf %97, %100 : vector<16x64xf32>
    %102 = arith.mulf %101, %101 : vector<16x64xf32>
    %103 = arith.mulf %101, %102 : vector<16x64xf32>
    %cst_47 = arith.constant 4.471500e-02 : f32
    %104 = vector.broadcast %cst_47 : f32 to vector<16x64xf32>
    %105 = arith.mulf %104, %103 : vector<16x64xf32>
    %106 = arith.addf %101, %105 : vector<16x64xf32>
    %cst_48 = arith.constant 0.797884583 : f32
    %107 = vector.broadcast %cst_48 : f32 to vector<16x64xf32>
    %108 = arith.mulf %107, %106 : vector<16x64xf32>
    %109 = math.tanh %108 : vector<16x64xf32>
    %cst_49 = arith.constant 1.000000e+00 : f32
    %110 = vector.broadcast %cst_49 : f32 to vector<16x64xf32>
    %111 = arith.addf %110, %109 : vector<16x64xf32>
    %cst_50 = arith.constant 5.000000e-01 : f32
    %112 = vector.broadcast %cst_50 : f32 to vector<16x64xf32>
    %113 = arith.mulf %112, %111 : vector<16x64xf32>
    %114 = arith.mulf %101, %113 : vector<16x64xf32>
    %c0_51 = arith.constant 0 : index
    %c0_52 = arith.constant 0 : index
    %c0_53 = arith.constant 0 : index
    %115 = vector.load %arg13[%c0_51, %c0_52, %c0_53] : memref<1x64x32xf32, #tpu.memory_space<vmem>>, vector<1x64x32xf32>
    %116 = vector.shape_cast %115 : vector<1x64x32xf32> to vector<64x32xf32>
    %cst_54 = arith.constant dense<0.000000e+00> : vector<16x32xf32>
    %117 = tpu.matmul %114, %116, %cst_54 {dimension_numbers = #tpu.dot_dimension_numbers<[1], [0], [0], [1], [0, 0, 1, 1], [], []>} : vector<16x64xf32>, vector<64x32xf32>, vector<16x32xf32> -> vector<16x32xf32>
    %c0_55 = arith.constant 0 : index
    %c0_56 = arith.constant 0 : index
    %c0_57 = arith.constant 0 : index
    %118 = vector.load %arg14[%c0_55, %c0_56, %c0_57] : memref<1x1x32xf32, #tpu.memory_space<vmem>>, vector<1x1x32xf32>
    %119 = vector.shape_cast %118 : vector<1x1x32xf32> to vector<1x32xf32>
    %120 = vector.broadcast %119 : vector<1x32xf32> to vector<16x32xf32>
    %121 = arith.addf %117, %120 : vector<16x32xf32>
    %122 = arith.addf %121, %94 : vector<16x32xf32>
    %c0_58 = arith.constant 0 : index
    %c0_59 = arith.constant 0 : index
    %c0_60 = arith.constant 0 : index
    %123 = vector.load %arg15[%c0_58, %c0_59, %c0_60] : memref<1x1x32xf32, #tpu.memory_space<vmem>>, vector<1x1x32xf32>
    %124 = vector.shape_cast %123 : vector<1x1x32xf32> to vector<1x32xf32>
    %c0_61 = arith.constant 0 : index
    %c0_62 = arith.constant 0 : index
    %c0_63 = arith.constant 0 : index
    %125 = vector.load %arg16[%c0_61, %c0_62, %c0_63] : memref<1x1x32xf32, #tpu.memory_space<vmem>>, vector<1x1x32xf32>
    %126 = vector.shape_cast %125 : vector<1x1x32xf32> to vector<1x32xf32>
    %cst_64 = arith.constant dense<0.000000e+00> : vector<16xf32>
    %127 = vector.multi_reduction <add>, %122, %cst_64 [1] : vector<16x32xf32> to vector<16xf32>
    %128 = vector.shape_cast %127 : vector<16xf32> to vector<16x1xf32>
    %cst_65 = arith.constant 3.200000e+01 : f32
    %129 = vector.broadcast %cst_65 : f32 to vector<16x1xf32>
    %130 = arith.divf %128, %129 : vector<16x1xf32>
    %131 = vector.broadcast %130 : vector<16x1xf32> to vector<16x32xf32>
    %132 = arith.subf %122, %131 : vector<16x32xf32>
    %133 = arith.mulf %132, %132 : vector<16x32xf32>
    %cst_66 = arith.constant dense<0.000000e+00> : vector<16xf32>
    %134 = vector.multi_reduction <add>, %133, %cst_66 [1] : vector<16x32xf32> to vector<16xf32>
    %135 = vector.shape_cast %134 : vector<16xf32> to vector<16x1xf32>
    %cst_67 = arith.constant 3.200000e+01 : f32
    %136 = vector.broadcast %cst_67 : f32 to vector<16x1xf32>
    %137 = arith.divf %135, %136 : vector<16x1xf32>
    %cst_68 = arith.constant 9.99999996E-13 : f32
    %138 = vector.broadcast %cst_68 : f32 to vector<16x1xf32>
    %139 = arith.addf %137, %138 : vector<16x1xf32>
    %140 = math.rsqrt %139 : vector<16x1xf32>
    %141 = vector.broadcast %140 : vector<16x1xf32> to vector<16x32xf32>
    %142 = arith.mulf %132, %141 : vector<16x32xf32>
    %143 = vector.broadcast %124 : vector<1x32xf32> to vector<16x32xf32>
    %144 = arith.mulf %142, %143 : vector<16x32xf32>
    %145 = vector.broadcast %126 : vector<1x32xf32> to vector<16x32xf32>
    %146 = arith.addf %144, %145 : vector<16x32xf32>
    %c0_69 = arith.constant 0 : index
    %c0_70 = arith.constant 0 : index
    %147 = vector.load %arg22[%c0_69, %c0_70] : memref<16x32xf32, #tpu.memory_space<vmem>>, vector<16x32xf32>
    tpu.vector_store %arg22[%c0_69, %c0_70], %146 {strides = array<i32>} : memref<16x32xf32, #tpu.memory_space<vmem>>, vector<16x32xf32>,
    %c1_i32 = arith.constant 1 : i32
    %148 = arith.cmpi eq, %arg0, %c1_i32 : i32
    %149 = arith.extui %148 : i1 to i32
    %c0_i32_71 = arith.constant 0 : i32
    %150 = arith.cmpi ne, %149, %c0_i32_71 : i32
    scf.if %150 {
      %151 = vector.extract_strided_slice %146 {offsets = [0, 0], sizes = [1, 32], strides = [1, 1]} : vector<16x32xf32> to vector<1x32xf32>
      %152 = vector.extract_strided_slice %146 {offsets = [8, 0], sizes = [1, 32], strides = [1, 1]} : vector<16x32xf32> to vector<1x32xf32>
      %153 = tpu.concatenate %151, %152 in 0 : vector<1x32xf32>, vector<1x32xf32> -> vector<2x32xf32>
      %c0_72 = arith.constant 0 : index
      %c0_73 = arith.constant 0 : index
      %154 = vector.load %arg17[%c0_72, %c0_73] : memref<32x32xf32, #tpu.memory_space<vmem>>, vector<32x32xf32>
      %cst_74 = arith.constant dense<0.000000e+00> : vector<2x32xf32>
      %155 = tpu.matmul %153, %154, %cst_74 {dimension_numbers = #tpu.dot_dimension_numbers<[1], [0], [0], [1], [0, 0, 1, 1], [], []>} : vector<2x32xf32>, vector<32x32xf32>, vector<2x32xf32> -> vector<2x32xf32>
      %c0_75 = arith.constant 0 : index
      %c0_76 = arith.constant 0 : index
      %156 = vector.load %arg18[%c0_75, %c0_76] : memref<1x32xf32, #tpu.memory_space<vmem>>, vector<1x32xf32>
      %157 = vector.broadcast %156 : vector<1x32xf32> to vector<2x32xf32>
      %158 = arith.addf %155, %157 : vector<2x32xf32>
      %159 = math.tanh %158 : vector<2x32xf32>
      %c0_77 = arith.constant 0 : index
      %c0_78 = arith.constant 0 : index
      %160 = vector.load %arg19[%c0_77, %c0_78] : memref<32x5xf32, #tpu.memory_space<vmem>>, vector<32x5xf32>
      %cst_79 = arith.constant dense<0.000000e+00> : vector<2x5xf32>
      %161 = tpu.matmul %159, %160, %cst_79 {dimension_numbers = #tpu.dot_dimension_numbers<[1], [0], [0], [1], [0, 0, 1, 1], [], []>} : vector<2x32xf32>, vector<32x5xf32>, vector<2x5xf32> -> vector<2x5xf32>
      %c0_80 = arith.constant 0 : index
      %c0_81 = arith.constant 0 : index
      %162 = vector.load %arg20[%c0_80, %c0_81] : memref<1x5xf32, #tpu.memory_space<vmem>>, vector<1x5xf32>
      %163 = vector.broadcast %162 : vector<1x5xf32> to vector<2x5xf32>
      %164 = arith.addf %161, %163 : vector<2x5xf32>
      %c0_82 = arith.constant 0 : index
      %c0_83 = arith.constant 0 : index
      %165 = vector.load %arg21[%c0_82, %c0_83] : memref<2x5xf32, #tpu.memory_space<vmem>>, vector<2x5xf32>
      tpu.vector_store %arg21[%c0_82, %c0_83], %164 {strides = array<i32>} : memref<2x5xf32, #tpu.memory_space<vmem>>, vector<2x5xf32>,
    } else {
    }
    return
  }
  func.func @transform_0(%arg0: i32) -> (i32, i32) {
    %c0_i32 = arith.constant 0 : i32
    %c0_i32_0 = arith.constant 0 : i32
    %c0_i32_1 = arith.constant 0 : i32
    return %c0_i32, %c0_i32_0 : i32, i32
  }
  func.func @transform_1(%arg0: i32) -> (i32, i32) {
    %c0_i32 = arith.constant 0 : i32
    %c0_i32_0 = arith.constant 0 : i32
    %c0_i32_1 = arith.constant 0 : i32
    return %c0_i32, %c0_i32_0 : i32, i32
  }
  func.func @transform_2(%arg0: i32) -> (i32, i32) {
    %c0_i32 = arith.constant 0 : i32
    %c0_i32_0 = arith.constant 0 : i32
    %c0_i32_1 = arith.constant 0 : i32
    return %c0_i32, %c0_i32_0 : i32, i32
  }
  func.func @transform_3(%arg0: i32) -> (i32, i32) {
    %c0_i32 = arith.constant 0 : i32
    %c0_i32_0 = arith.constant 0 : i32
    %c0_i32_1 = arith.constant 0 : i32
    return %c0_i32, %c0_i32_0 : i32, i32
  }
  func.func @transform_4(%arg0: i32) -> (i32, i32, i32) {
    %c0_i32 = arith.constant 0 : i32
    %c0_i32_0 = arith.constant 0 : i32
    %c0_i32_1 = arith.constant 0 : i32
    return %arg0, %c0_i32, %c0_i32_0 : i32, i32, i32
  }
  func.func @transform_5(%arg0: i32) -> (i32, i32, i32) {
    %c0_i32 = arith.constant 0 : i32
    %c0_i32_0 = arith.constant 0 : i32
    %c0_i32_1 = arith.constant 0 : i32
    return %arg0, %c0_i32, %c0_i32_0 : i32, i32, i32
  }
  func.func @transform_6(%arg0: i32) -> (i32, i32, i32) {
    %c0_i32 = arith.constant 0 : i32
    %c0_i32_0 = arith.constant 0 : i32
    %c0_i32_1 = arith.constant 0 : i32
    return %arg0, %c0_i32, %c0_i32_0 : i32, i32, i32
  }
  func.func @transform_7(%arg0: i32) -> (i32, i32, i32) {
    %c0_i32 = arith.constant 0 : i32
    %c0_i32_0 = arith.constant 0 : i32
    %c0_i32_1 = arith.constant 0 : i32
    return %arg0, %c0_i32, %c0_i32_0 : i32, i32, i32
  }
  func.func @transform_8(%arg0: i32) -> (i32, i32, i32) {
    %c0_i32 = arith.constant 0 : i32
    %c0_i32_0 = arith.constant 0 : i32
    %c0_i32_1 = arith.constant 0 : i32
    return %arg0, %c0_i32, %c0_i32_0 : i32, i32, i32
  }
  func.func @transform_9(%arg0: i32) -> (i32, i32, i32) {
    %c0_i32 = arith.constant 0 : i32
    %c0_i32_0 = arith.constant 0 : i32
    %c0_i32_1 = arith.constant 0 : i32
    return %arg0, %c0_i32, %c0_i32_0 : i32, i32, i32
  }
  func.func @transform_10(%arg0: i32) -> (i32, i32, i32) {
    %c0_i32 = arith.constant 0 : i32
    %c0_i32_0 = arith.constant 0 : i32
    %c0_i32_1 = arith.constant 0 : i32
    return %arg0, %c0_i32, %c0_i32_0 : i32, i32, i32
  }
  func.func @transform_11(%arg0: i32) -> (i32, i32, i32) {
    %c0_i32 = arith.constant 0 : i32
    %c0_i32_0 = arith.constant 0 : i32
    %c0_i32_1 = arith.constant 0 : i32
    return %arg0, %c0_i32, %c0_i32_0 : i32, i32, i32
  }
  func.func @transform_12(%arg0: i32) -> (i32, i32, i32) {
    %c0_i32 = arith.constant 0 : i32
    %c0_i32_0 = arith.constant 0 : i32
    %c0_i32_1 = arith.constant 0 : i32
    return %arg0, %c0_i32, %c0_i32_0 : i32, i32, i32
  }
  func.func @transform_13(%arg0: i32) -> (i32, i32, i32) {
    %c0_i32 = arith.constant 0 : i32
    %c0_i32_0 = arith.constant 0 : i32
    %c0_i32_1 = arith.constant 0 : i32
    return %arg0, %c0_i32, %c0_i32_0 : i32, i32, i32
  }
  func.func @transform_14(%arg0: i32) -> (i32, i32, i32) {
    %c0_i32 = arith.constant 0 : i32
    %c0_i32_0 = arith.constant 0 : i32
    %c0_i32_1 = arith.constant 0 : i32
    return %arg0, %c0_i32, %c0_i32_0 : i32, i32, i32
  }
  func.func @transform_15(%arg0: i32) -> (i32, i32, i32) {
    %c0_i32 = arith.constant 0 : i32
    %c0_i32_0 = arith.constant 0 : i32
    %c0_i32_1 = arith.constant 0 : i32
    return %arg0, %c0_i32, %c0_i32_0 : i32, i32, i32
  }
  func.func @transform_16(%arg0: i32) -> (i32, i32) {
    %c0_i32 = arith.constant 0 : i32
    %c0_i32_0 = arith.constant 0 : i32
    %c0_i32_1 = arith.constant 0 : i32
    return %c0_i32, %c0_i32_0 : i32, i32
  }
  func.func @transform_17(%arg0: i32) -> (i32, i32) {
    %c0_i32 = arith.constant 0 : i32
    %c0_i32_0 = arith.constant 0 : i32
    %c0_i32_1 = arith.constant 0 : i32
    return %c0_i32, %c0_i32_0 : i32, i32
  }
  func.func @transform_18(%arg0: i32) -> (i32, i32) {
    %c0_i32 = arith.constant 0 : i32
    %c0_i32_0 = arith.constant 0 : i32
    %c0_i32_1 = arith.constant 0 : i32
    return %c0_i32, %c0_i32_0 : i32, i32
  }
  func.func @transform_19(%arg0: i32) -> (i32, i32) {
    %c0_i32 = arith.constant 0 : i32
    %c0_i32_0 = arith.constant 0 : i32
    %c0_i32_1 = arith.constant 0 : i32
    return %c0_i32, %c0_i32_0 : i32, i32
  }
  func.func @transform_20(%arg0: i32) -> (i32, i32) {
    %c0_i32 = arith.constant 0 : i32
    %c0_i32_0 = arith.constant 0 : i32
    %c0_i32_1 = arith.constant 0 : i32
    return %c0_i32, %c0_i32_0 : i32, i32
  }
}

</mosaic_0001>

<llo_original>
// kernel: bert_regressor_forward.1
$region0: #{bert_regressor_forward.1}
  #allocation0 [shape = 'u32[]', space=smem, size = 0x4, offset = 0x4, fixed_abs, tag = 'smem constant byte address 0x4 - core index']
  #allocation1 [shape = 'u32[144,128]{1,0:T(1,128)}', space=vmem, size = 0x12000, scoped, tag = 'internal scratch']
  #allocation2 [shape = 'f32[16,32]{1,0:T(8,128)}', space=vmem, size = 0x2000, scoped, tag = 'scratch operand']
  %s0 = inlined_call_operand.vmem [shape: f32[16,32], index: 0, kind: input, shape index: {}]
  %s1 = inlined_call_operand.vmem [shape: f32[2,8], index: 1, kind: input, shape index: {}]
  %s2 = inlined_call_operand.vmem [shape: f32[1,32], index: 2, kind: input, shape index: {}]
  %s3 = inlined_call_operand.vmem [shape: f32[1,32], index: 3, kind: input, shape index: {}, may-alias: {3,17}]
  %s4 = inlined_call_operand.vmem [shape: f32[2,32,96], index: 4, kind: input, shape index: {}]
  %s5 = inlined_call_operand.vmem [shape: f32[2,1,96], index: 5, kind: input, shape index: {}]
  %s6 = inlined_call_operand.hbm [shape: f32[2,32,32], index: 6, kind: input, shape index: {}]
  %s7 = inlined_call_operand.vmem [shape: f32[2,1,32], index: 7, kind: input, shape index: {}, may-alias: {7,9,13,15}]
  %s8 = inlined_call_operand.vmem [shape: f32[2,1,32], index: 8, kind: input, shape index: {}, may-alias: {8,14}]
  %s9 = inlined_call_operand.vmem [shape: f32[2,1,32], index: 9, kind: input, shape index: {}, may-alias: {7,9,13,15}]
  %s10 = inlined_call_operand.hbm [shape: f32[2,32,64], index: 10, kind: input, shape index: {}]
  %s11 = inlined_call_operand.vmem [shape: f32[2,1,64], index: 11, kind: input, shape index: {}]
  %s12 = inlined_call_operand.vmem [shape: f32[2,64,32], index: 12, kind: input, shape index: {}]
  %s13 = inlined_call_operand.vmem [shape: f32[2,1,32], index: 13, kind: input, shape index: {}, may-alias: {7,9,13,15}]
  %s14 = inlined_call_operand.vmem [shape: f32[2,1,32], index: 14, kind: input, shape index: {}, may-alias: {8,14}]
  %s15 = inlined_call_operand.vmem [shape: f32[2,1,32], index: 15, kind: input, shape index: {}, may-alias: {7,9,13,15}]
  %s16 = inlined_call_operand.vmem [shape: f32[32,32], index: 16, kind: input, shape index: {}]
  %s17 = inlined_call_operand.vmem [shape: f32[1,32], index: 17, kind: input, shape index: {}, may-alias: {3,17}]
  %s18 = inlined_call_operand.hbm [shape: f32[32,5], index: 18, kind: input, shape index: {}]
  %s19 = inlined_call_operand.vmem [shape: f32[1,5], index: 19, kind: input, shape index: {}]
  %s20 = inlined_call_operand.hbm [shape: f32[2,5], index: 20, kind: output, shape index: {}]
  %s21 = sld [smem:[#allocation0]]
  $region133: #{bert_regressor_forward.1} parent=0
    _
  %s23 = ssub.s32 1, %s21
  %s24 = scalar_select 0, %s23, %s21
  $region1: #{bert_regressor_forward.1} parent=0
    #allocation3 [shape = 'u8[32768]{0}', space=vmem, size = 0x8000, scoped, tag = 'input window, operand 6']
    #allocation4 [shape = 's32[2]{0}', space=sflag, size = 0x8, scoped, tag = 'scoped memory for bert_regressor_forward.1']
    #allocation5 [shape = 's32[2]{0}', space=sflag, size = 0x8, scoped, tag = 'scoped memory for bert_regressor_forward.1']
    #allocation6 [shape = 'u8[32768]{0}', space=vmem, size = 0x8000, scoped, tag = 'input window, operand 10']
    #allocation7 [shape = 's32[2]{0}', space=sflag, size = 0x8, scoped, tag = 'scoped memory for bert_regressor_forward.1']
    #allocation8 [shape = 'u8[16384]{0}', space=vmem, size = 0x4000, scoped, tag = 'input window, operand 18, single buffered']
    #allocation9 [shape = 'u8[1024]{0}', space=vmem, size = 0x400, scoped, tag = 'output window, operand 0, single buffered']
    %25 = vsyncpa [#allocation4], 0
    %s26 = scalar_lea.sflag [#allocation4], 1
    %27 = vsyncpa %s26, 0
    %28 = vsyncpa [#allocation7], 0
    %s29 = scalar_lea.sflag [#allocation7], 1
    %30 = vsyncpa %s29, 0
    %31 = vsyncpa [#allocation5], 0
    loop: start=0, step=1, limit=4
    $region2: #{bert_regressor_forward.1} parent=1 // loop_pre_header
      _
    $region3: #{bert_regressor_forward.1} parent=1 // loop_header
      %s33 = sphi 0, %s37
      %p34 = scmp.ge.s32.totalorder %s33, 4
      %s41 = sphi 0, %s41
      %s43 = sphi 0, %s41
      %s44 = sphi 0, %s43
      %s58 = sphi 0, %s44
      %s62 = sphi 0, %s62
      %s64 = sphi 0, %s62
      %s65 = sphi 0, %s64
      %s79 = sphi 0, %s65
      %s83 = sphi 0, %s83
      %s85 = sphi 0, %s83
      %s86 = sphi 0, %s85
      %s100 = sphi 0, %s86
      %s104 = sphi 0, %s104
      %s106 = sphi 0, %s104
      %s107 = sphi 0, %s106
      %s121 = sphi 0, %s107
      %s127 = sphi 0, %s129
      %s130 = sphi 0, %s127
      %s131 = sphi 0, %s130
      %s147 = sphi 0, %s131
      %s153 = sphi 0, %s155
      %s156 = sphi 0, %s153
      %s157 = sphi 0, %s156
      %s173 = sphi 0, %s157
      %s179 = sphi 0, %s181
      %s182 = sphi 0, %s179
      %s183 = sphi 0, %s182
      %s199 = sphi 0, %s183
      %s205 = sphi 0, %s207
      %s208 = sphi 0, %s205
      %s209 = sphi 0, %s208
      %s225 = sphi 0, %s209
      %s231 = sphi 0, %s233
      %s234 = sphi 0, %s231
      %s235 = sphi 0, %s234
      %s251 = sphi 0, %s235
      %s257 = sphi 0, %s259
      %s260 = sphi 0, %s257
      %s261 = sphi 0, %s260
      %s277 = sphi 0, %s261
      %s283 = sphi 0, %s285
      %s286 = sphi 0, %s283
      %s287 = sphi 0, %s286
      %s303 = sphi 0, %s287
      %s309 = sphi 0, %s311
      %s312 = sphi 0, %s309
      %s313 = sphi 0, %s312
      %s329 = sphi 0, %s313
      %s335 = sphi 0, %s337
      %s338 = sphi 0, %s335
      %s339 = sphi 0, %s338
      %s355 = sphi 0, %s339
      %s361 = sphi 0, %s363
      %s364 = sphi 0, %s361
      %s365 = sphi 0, %s364
      %s381 = sphi 0, %s365
      %s387 = sphi 0, %s389
      %s390 = sphi 0, %s387
      %s391 = sphi 0, %s390
      %s407 = sphi 0, %s391
      %s413 = sphi 0, %s415
      %s416 = sphi 0, %s413
      %s417 = sphi 0, %s416
      %s433 = sphi 0, %s417
      %s437 = sphi 0, %s437
      %s439 = sphi 0, %s437
      %s440 = sphi 0, %s439
      %s454 = sphi 0, %s440
      %s458 = sphi 0, %s458
      %s460 = sphi 0, %s458
      %s461 = sphi 0, %s460
      %s475 = sphi 0, %s461
      %s479 = sphi 0, %s479
      %s481 = sphi 0, %s479
      %s482 = sphi 0, %s481
      %s496 = sphi 0, %s482
      %s500 = sphi 0, %s500
      %s502 = sphi 0, %s500
      %s503 = sphi 0, %s502
      %s517 = sphi 0, %s503
      %s521 = sphi 0, %s521
      %s523 = sphi 0, %s521
      %s524 = sphi 0, %s523
      %s538 = sphi 0, %s524
    $region4: #{bert_regressor_forward.1} parent=1 // loop_header_branch
      %36 = sbr.rel (%p34) target = $region8
    $region5: #{bert_regressor_forward.1} parent=1 // loop_body
      %s38 = ssub.s32 %s33, 1
      %s39 = ssub.s32 %s33, 2
      %s40 = sadd.s32 %s33, 1
      %s42 = sadd.s32 %s41, 1
      %p45 = scmp.eq.s32.totalorder %s33, 1
      %p46 = scmp.ne.s32.totalorder %s41, %s43
      %p47 = scmp.eq.s32.totalorder %s33, 0
      %p48 = por %p46, %p47
      %p49 = scmp.ne.s32.totalorder %s41, %s43
      %p50 = scmp.eq.s32.totalorder %s38, 1
      %p51 = por %p49, %p50
      %p52 = scmp.ne.s32.totalorder %s43, %s44
      %p53 = scmp.eq.s32.totalorder %s38, 0
      %p54 = por %p52, %p53
      %p55 = scmp.ne.s32.totalorder %s43, %s44
      %p56 = scmp.eq.s32.totalorder %s39, 1
      %p57 = por %p55, %p56
      %p59 = scmp.ne.s32.totalorder %s44, %s58
      %p60 = scmp.eq.s32.totalorder %s39, 0
      %p61 = por %p59, %p60
      %s63 = sadd.s32 %s62, 1
      %p66 = scmp.eq.s32.totalorder %s33, 1
      %p67 = scmp.ne.s32.totalorder %s62, %s64
      %p68 = scmp.eq.s32.totalorder %s33, 0
      %p69 = por %p67, %p68
      %p70 = scmp.ne.s32.totalorder %s62, %s64
      %p71 = scmp.eq.s32.totalorder %s38, 1
      %p72 = por %p70, %p71
      %p73 = scmp.ne.s32.totalorder %s64, %s65
      %p74 = scmp.eq.s32.totalorder %s38, 0
      %p75 = por %p73, %p74
      %p76 = scmp.ne.s32.totalorder %s64, %s65
      %p77 = scmp.eq.s32.totalorder %s39, 1
      %p78 = por %p76, %p77
      %p80 = scmp.ne.s32.totalorder %s65, %s79
      %p81 = scmp.eq.s32.totalorder %s39, 0
      %p82 = por %p80, %p81
      %s84 = sadd.s32 %s83, 1
      %p87 = scmp.eq.s32.totalorder %s33, 1
      %p88 = scmp.ne.s32.totalorder %s83, %s85
      %p89 = scmp.eq.s32.totalorder %s33, 0
      %p90 = por %p88, %p89
      %p91 = scmp.ne.s32.totalorder %s83, %s85
      %p92 = scmp.eq.s32.totalorder %s38, 1
      %p93 = por %p91, %p92
      %p94 = scmp.ne.s32.totalorder %s85, %s86
      %p95 = scmp.eq.s32.totalorder %s38, 0
      %p96 = por %p94, %p95
      %p97 = scmp.ne.s32.totalorder %s85, %s86
      %p98 = scmp.eq.s32.totalorder %s39, 1
      %p99 = por %p97, %p98
      %p101 = scmp.ne.s32.totalorder %s86, %s100
      %p102 = scmp.eq.s32.totalorder %s39, 0
      %p103 = por %p101, %p102
      %s105 = sadd.s32 %s104, 1
      %p108 = scmp.eq.s32.totalorder %s33, 1
      %p109 = scmp.ne.s32.totalorder %s104, %s106
      %p110 = scmp.eq.s32.totalorder %s33, 0
      %p111 = por %p109, %p110
      %p112 = scmp.ne.s32.totalorder %s104, %s106
      %p113 = scmp.eq.s32.totalorder %s38, 1
      %p114 = por %p112, %p113
      %p115 = scmp.ne.s32.totalorder %s106, %s107
      %p116 = scmp.eq.s32.totalorder %s38, 0
      %p117 = por %p115, %p116
      %p118 = scmp.ne.s32.totalorder %s106, %s107
      %p119 = scmp.eq.s32.totalorder %s39, 1
      %p120 = por %p118, %p119
      %p122 = scmp.ne.s32.totalorder %s107, %s121
      %p123 = scmp.eq.s32.totalorder %s39, 0
      %p124 = por %p122, %p123
      %s125 = ssub.s32 %s33, %s40
      %p126 = scmp.eq.s32.totalorder %s125, 0
      %s128 = sadd.s32 %s127, 1
      %s129 = scalar_select %p126, %s127, %s128
      %p132 = pneg %p126
      %p133 = scmp.eq.s32.totalorder %s33, 1
      %p134 = por %p132, %p133
      %p135 = scmp.ne.s32.totalorder %s127, %s130
      %p136 = scmp.eq.s32.totalorder %s33, 0
      %p137 = por %p135, %p136
      %p138 = scmp.ne.s32.totalorder %s127, %s130
      %p139 = scmp.eq.s32.totalorder %s38, 1
      %p140 = por %p138, %p139
      %p141 = scmp.ne.s32.totalorder %s130, %s131
      %p142 = scmp.eq.s32.totalorder %s38, 0
      %p143 = por %p141, %p142
      %p144 = scmp.ne.s32.totalorder %s130, %s131
      %p145 = scmp.eq.s32.totalorder %s39, 1
      %p146 = por %p144, %p145
      %p148 = scmp.ne.s32.totalorder %s131, %s147
      %p149 = scmp.eq.s32.totalorder %s39, 0
      %p150 = por %p148, %p149
      %s151 = ssub.s32 %s33, %s40
      %p152 = scmp.eq.s32.totalorder %s151, 0
      %s154 = sadd.s32 %s153, 1
      %s155 = scalar_select %p152, %s153, %s154
      %p158 = pneg %p152
      %p159 = scmp.eq.s32.totalorder %s33, 1
      %p160 = por %p158, %p159
      %p161 = scmp.ne.s32.totalorder %s153, %s156
      %p162 = scmp.eq.s32.totalorder %s33, 0
      %p163 = por %p161, %p162
      %p164 = scmp.ne.s32.totalorder %s153, %s156
      %p165 = scmp.eq.s32.totalorder %s38, 1
      %p166 = por %p164, %p165
      %p167 = scmp.ne.s32.totalorder %s156, %s157
      %p168 = scmp.eq.s32.totalorder %s38, 0
      %p169 = por %p167, %p168
      %p170 = scmp.ne.s32.totalorder %s156, %s157
      %p171 = scmp.eq.s32.totalorder %s39, 1
      %p172 = por %p170, %p171
      %p174 = scmp.ne.s32.totalorder %s157, %s173
      %p175 = scmp.eq.s32.totalorder %s39, 0
      %p176 = por %p174, %p175
      %s177 = ssub.s32 %s33, %s40
      %p178 = scmp.eq.s32.totalorder %s177, 0
      %s180 = sadd.s32 %s179, 1
      %s181 = scalar_select %p178, %s179, %s180
      %p184 = pneg %p178
      %p185 = scmp.eq.s32.totalorder %s33, 1
      %p186 = por %p184, %p185
      %p187 = scmp.ne.s32.totalorder %s179, %s182
      %p188 = scmp.eq.s32.totalorder %s33, 0
      %p189 = por %p187, %p188
      %p190 = scmp.ne.s32.totalorder %s179, %s182
      %p191 = scmp.eq.s32.totalorder %s38, 1
      %p192 = por %p190, %p191
      %p193 = scmp.ne.s32.totalorder %s182, %s183
      %p194 = scmp.eq.s32.totalorder %s38, 0
      %p195 = por %p193, %p194
      %p196 = scmp.ne.s32.totalorder %s182, %s183
      %p197 = scmp.eq.s32.totalorder %s39, 1
      %p198 = por %p196, %p197
      %p200 = scmp.ne.s32.totalorder %s183, %s199
      %p201 = scmp.eq.s32.totalorder %s39, 0
      %p202 = por %p200, %p201
      %s203 = ssub.s32 %s33, %s40
      %p204 = scmp.eq.s32.totalorder %s203, 0
      %s206 = sadd.s32 %s205, 1
      %s207 = scalar_select %p204, %s205, %s206
      %p210 = pneg %p204
      %p211 = scmp.eq.s32.totalorder %s33, 1
      %p212 = por %p210, %p211
      %p213 = scmp.ne.s32.totalorder %s205, %s208
      %p214 = scmp.eq.s32.totalorder %s33, 0
      %p215 = por %p213, %p214
      %p216 = scmp.ne.s32.totalorder %s205, %s208
      %p217 = scmp.eq.s32.totalorder %s38, 1
      %p218 = por %p216, %p217
      %p219 = scmp.ne.s32.totalorder %s208, %s209
      %p220 = scmp.eq.s32.totalorder %s38, 0
      %p221 = por %p219, %p220
      %p222 = scmp.ne.s32.totalorder %s208, %s209
      %p223 = scmp.eq.s32.totalorder %s39, 1
      %p224 = por %p222, %p223
      %p226 = scmp.ne.s32.totalorder %s209, %s225
      %p227 = scmp.eq.s32.totalorder %s39, 0
      %p228 = por %p226, %p227
      %s229 = ssub.s32 %s33, %s40
      %p230 = scmp.eq.s32.totalorder %s229, 0
      %s232 = sadd.s32 %s231, 1
      %s233 = scalar_select %p230, %s231, %s232
      %p236 = pneg %p230
      %p237 = scmp.eq.s32.totalorder %s33, 1
      %p238 = por %p236, %p237
      %p239 = scmp.ne.s32.totalorder %s231, %s234
      %p240 = scmp.eq.s32.totalorder %s33, 0
      %p241 = por %p239, %p240
      %p242 = scmp.ne.s32.totalorder %s231, %s234
      %p243 = scmp.eq.s32.totalorder %s38, 1
      %p244 = por %p242, %p243
      %p245 = scmp.ne.s32.totalorder %s234, %s235
      %p246 = scmp.eq.s32.totalorder %s38, 0
      %p247 = por %p245, %p246
      %p248 = scmp.ne.s32.totalorder %s234, %s235
      %p249 = scmp.eq.s32.totalorder %s39, 1
      %p250 = por %p248, %p249
      %p252 = scmp.ne.s32.totalorder %s235, %s251
      %p253 = scmp.eq.s32.totalorder %s39, 0
      %p254 = por %p252, %p253
      %s255 = ssub.s32 %s33, %s40
      %p256 = scmp.eq.s32.totalorder %s255, 0
      %s258 = sadd.s32 %s257, 1
      %s259 = scalar_select %p256, %s257, %s258
      %p262 = pneg %p256
      %p263 = scmp.eq.s32.totalorder %s33, 1
      %p264 = por %p262, %p263
      %p265 = scmp.ne.s32.totalorder %s257, %s260
      %p266 = scmp.eq.s32.totalorder %s33, 0
      %p267 = por %p265, %p266
      %p268 = scmp.ne.s32.totalorder %s257, %s260
      %p269 = scmp.eq.s32.totalorder %s38, 1
      %p270 = por %p268, %p269
      %p271 = scmp.ne.s32.totalorder %s260, %s261
      %p272 = scmp.eq.s32.totalorder %s38, 0
      %p273 = por %p271, %p272
      %p274 = scmp.ne.s32.totalorder %s260, %s261
      %p275 = scmp.eq.s32.totalorder %s39, 1
      %p276 = por %p274, %p275
      %p278 = scmp.ne.s32.totalorder %s261, %s277
      %p279 = scmp.eq.s32.totalorder %s39, 0
      %p280 = por %p278, %p279
      %s281 = ssub.s32 %s33, %s40
      %p282 = scmp.eq.s32.totalorder %s281, 0
      %s284 = sadd.s32 %s283, 1
      %s285 = scalar_select %p282, %s283, %s284
      %p288 = pneg %p282
      %p289 = scmp.eq.s32.totalorder %s33, 1
      %p290 = por %p288, %p289
      %p291 = scmp.ne.s32.totalorder %s283, %s286
      %p292 = scmp.eq.s32.totalorder %s33, 0
      %p293 = por %p291, %p292
      %p294 = scmp.ne.s32.totalorder %s283, %s286
      %p295 = scmp.eq.s32.totalorder %s38, 1
      %p296 = por %p294, %p295
      %p297 = scmp.ne.s32.totalorder %s286, %s287
      %p298 = scmp.eq.s32.totalorder %s38, 0
      %p299 = por %p297, %p298
      %p300 = scmp.ne.s32.totalorder %s286, %s287
      %p301 = scmp.eq.s32.totalorder %s39, 1
      %p302 = por %p300, %p301
      %p304 = scmp.ne.s32.totalorder %s287, %s303
      %p305 = scmp.eq.s32.totalorder %s39, 0
      %p306 = por %p304, %p305
      %s307 = ssub.s32 %s33, %s40
      %p308 = scmp.eq.s32.totalorder %s307, 0
      %s310 = sadd.s32 %s309, 1
      %s311 = scalar_select %p308, %s309, %s310
      %p314 = pneg %p308
      %p315 = scmp.eq.s32.totalorder %s33, 1
      %p316 = por %p314, %p315
      %p317 = scmp.ne.s32.totalorder %s309, %s312
      %p318 = scmp.eq.s32.totalorder %s33, 0
      %p319 = por %p317, %p318
      %p320 = scmp.ne.s32.totalorder %s309, %s312
      %p321 = scmp.eq.s32.totalorder %s38, 1
      %p322 = por %p320, %p321
      %p323 = scmp.ne.s32.totalorder %s312, %s313
      %p324 = scmp.eq.s32.totalorder %s38, 0
      %p325 = por %p323, %p324
      %p326 = scmp.ne.s32.totalorder %s312, %s313
      %p327 = scmp.eq.s32.totalorder %s39, 1
      %p328 = por %p326, %p327
      %p330 = scmp.ne.s32.totalorder %s313, %s329
      %p331 = scmp.eq.s32.totalorder %s39, 0
      %p332 = por %p330, %p331
      %s333 = ssub.s32 %s33, %s40
      %p334 = scmp.eq.s32.totalorder %s333, 0
      %s336 = sadd.s32 %s335, 1
      %s337 = scalar_select %p334, %s335, %s336
      %p340 = pneg %p334
      %p341 = scmp.eq.s32.totalorder %s33, 1
      %p342 = por %p340, %p341
      %p343 = scmp.ne.s32.totalorder %s335, %s338
      %p344 = scmp.eq.s32.totalorder %s33, 0
      %p345 = por %p343, %p344
      %p346 = scmp.ne.s32.totalorder %s335, %s338
      %p347 = scmp.eq.s32.totalorder %s38, 1
      %p348 = por %p346, %p347
      %p349 = scmp.ne.s32.totalorder %s338, %s339
      %p350 = scmp.eq.s32.totalorder %s38, 0
      %p351 = por %p349, %p350
      %p352 = scmp.ne.s32.totalorder %s338, %s339
      %p353 = scmp.eq.s32.totalorder %s39, 1
      %p354 = por %p352, %p353
      %p356 = scmp.ne.s32.totalorder %s339, %s355
      %p357 = scmp.eq.s32.totalorder %s39, 0
      %p358 = por %p356, %p357
      %s359 = ssub.s32 %s33, %s40
      %p360 = scmp.eq.s32.totalorder %s359, 0
      %s362 = sadd.s32 %s361, 1
      %s363 = scalar_select %p360, %s361, %s362
      %p366 = pneg %p360
      %p367 = scmp.eq.s32.totalorder %s33, 1
      %p368 = por %p366, %p367
      %p369 = scmp.ne.s32.totalorder %s361, %s364
      %p370 = scmp.eq.s32.totalorder %s33, 0
      %p371 = por %p369, %p370
      %p372 = scmp.ne.s32.totalorder %s361, %s364
      %p373 = scmp.eq.s32.totalorder %s38, 1
      %p374 = por %p372, %p373
      %p375 = scmp.ne.s32.totalorder %s364, %s365
      %p376 = scmp.eq.s32.totalorder %s38, 0
      %p377 = por %p375, %p376
      %p378 = scmp.ne.s32.totalorder %s364, %s365
      %p379 = scmp.eq.s32.totalorder %s39, 1
      %p380 = por %p378, %p379
      %p382 = scmp.ne.s32.totalorder %s365, %s381
      %p383 = scmp.eq.s32.totalorder %s39, 0
      %p384 = por %p382, %p383
      %s385 = ssub.s32 %s33, %s40
      %p386 = scmp.eq.s32.totalorder %s385, 0
      %s388 = sadd.s32 %s387, 1
      %s389 = scalar_select %p386, %s387, %s388
      %p392 = pneg %p386
      %p393 = scmp.eq.s32.totalorder %s33, 1
      %p394 = por %p392, %p393
      %p395 = scmp.ne.s32.totalorder %s387, %s390
      %p396 = scmp.eq.s32.totalorder %s33, 0
      %p397 = por %p395, %p396
      %p398 = scmp.ne.s32.totalorder %s387, %s390
      %p399 = scmp.eq.s32.totalorder %s38, 1
      %p400 = por %p398, %p399
      %p401 = scmp.ne.s32.totalorder %s390, %s391
      %p402 = scmp.eq.s32.totalorder %s38, 0
      %p403 = por %p401, %p402
      %p404 = scmp.ne.s32.totalorder %s390, %s391
      %p405 = scmp.eq.s32.totalorder %s39, 1
      %p406 = por %p404, %p405
      %p408 = scmp.ne.s32.totalorder %s391, %s407
      %p409 = scmp.eq.s32.totalorder %s39, 0
      %p410 = por %p408, %p409
      %s411 = ssub.s32 %s33, %s40
      %p412 = scmp.eq.s32.totalorder %s411, 0
      %s414 = sadd.s32 %s413, 1
      %s415 = scalar_select %p412, %s413, %s414
      %p418 = pneg %p412
      %p419 = scmp.eq.s32.totalorder %s33, 1
      %p420 = por %p418, %p419
      %p421 = scmp.ne.s32.totalorder %s413, %s416
      %p422 = scmp.eq.s32.totalorder %s33, 0
      %p423 = por %p421, %p422
      %p424 = scmp.ne.s32.totalorder %s413, %s416
      %p425 = scmp.eq.s32.totalorder %s38, 1
      %p426 = por %p424, %p425
      %p427 = scmp.ne.s32.totalorder %s416, %s417
      %p428 = scmp.eq.s32.totalorder %s38, 0
      %p429 = por %p427, %p428
      %p430 = scmp.ne.s32.totalorder %s416, %s417
      %p431 = scmp.eq.s32.totalorder %s39, 1
      %p432 = por %p430, %p431
      %p434 = scmp.ne.s32.totalorder %s417, %s433
      %p435 = scmp.eq.s32.totalorder %s39, 0
      %p436 = por %p434, %p435
      %s438 = sadd.s32 %s437, 1
      %p441 = scmp.eq.s32.totalorder %s33, 1
      %p442 = scmp.ne.s32.totalorder %s437, %s439
      %p443 = scmp.eq.s32.totalorder %s33, 0
      %p444 = por %p442, %p443
      %p445 = scmp.ne.s32.totalorder %s437, %s439
      %p446 = scmp.eq.s32.totalorder %s38, 1
      %p447 = por %p445, %p446
      %p448 = scmp.ne.s32.totalorder %s439, %s440
      %p449 = scmp.eq.s32.totalorder %s38, 0
      %p450 = por %p448, %p449
      %p451 = scmp.ne.s32.totalorder %s439, %s440
      %p452 = scmp.eq.s32.totalorder %s39, 1
      %p453 = por %p451, %p452
      %p455 = scmp.ne.s32.totalorder %s440, %s454
      %p456 = scmp.eq.s32.totalorder %s39, 0
      %p457 = por %p455, %p456
      %s459 = sadd.s32 %s458, 1
      %p462 = scmp.eq.s32.totalorder %s33, 1
      %p463 = scmp.ne.s32.totalorder %s458, %s460
      %p464 = scmp.eq.s32.totalorder %s33, 0
      %p465 = por %p463, %p464
      %p466 = scmp.ne.s32.totalorder %s458, %s460
      %p467 = scmp.eq.s32.totalorder %s38, 1
      %p468 = por %p466, %p467
      %p469 = scmp.ne.s32.totalorder %s460, %s461
      %p470 = scmp.eq.s32.totalorder %s38, 0
      %p471 = por %p469, %p470
      %p472 = scmp.ne.s32.totalorder %s460, %s461
      %p473 = scmp.eq.s32.totalorder %s39, 1
      %p474 = por %p472, %p473
      %p476 = scmp.ne.s32.totalorder %s461, %s475
      %p477 = scmp.eq.s32.totalorder %s39, 0
      %p478 = por %p476, %p477
      %s480 = sadd.s32 %s479, 1
      %p483 = scmp.eq.s32.totalorder %s33, 1
      %p484 = scmp.ne.s32.totalorder %s479, %s481
      %p485 = scmp.eq.s32.totalorder %s33, 0
      %p486 = por %p484, %p485
      %p487 = scmp.ne.s32.totalorder %s479, %s481
      %p488 = scmp.eq.s32.totalorder %s38, 1
      %p489 = por %p487, %p488
      %p490 = scmp.ne.s32.totalorder %s481, %s482
      %p491 = scmp.eq.s32.totalorder %s38, 0
      %p492 = por %p490, %p491
      %p493 = scmp.ne.s32.totalorder %s481, %s482
      %p494 = scmp.eq.s32.totalorder %s39, 1
      %p495 = por %p493, %p494
      %p497 = scmp.ne.s32.totalorder %s482, %s496
      %p498 = scmp.eq.s32.totalorder %s39, 0
      %p499 = por %p497, %p498
      %s501 = sadd.s32 %s500, 1
      %p504 = scmp.eq.s32.totalorder %s33, 1
      %p505 = scmp.ne.s32.totalorder %s500, %s502
      %p506 = scmp.eq.s32.totalorder %s33, 0
      %p507 = por %p505, %p506
      %p508 = scmp.ne.s32.totalorder %s500, %s502
      %p509 = scmp.eq.s32.totalorder %s38, 1
      %p510 = por %p508, %p509
      %p511 = scmp.ne.s32.totalorder %s502, %s503
      %p512 = scmp.eq.s32.totalorder %s38, 0
      %p513 = por %p511, %p512
      %p514 = scmp.ne.s32.totalorder %s502, %s503
      %p515 = scmp.eq.s32.totalorder %s39, 1
      %p516 = por %p514, %p515
      %p518 = scmp.ne.s32.totalorder %s503, %s517
      %p519 = scmp.eq.s32.totalorder %s39, 0
      %p520 = por %p518, %p519
      %s522 = sadd.s32 %s521, 1
      %p525 = scmp.eq.s32.totalorder %s33, 1
      %p526 = scmp.ne.s32.totalorder %s521, %s523
      %p527 = scmp.eq.s32.totalorder %s33, 0
      %p528 = por %p526, %p527
      %p529 = scmp.ne.s32.totalorder %s521, %s523
      %p530 = scmp.eq.s32.totalorder %s38, 1
      %p531 = por %p529, %p530
      %p532 = scmp.ne.s32.totalorder %s523, %s524
      %p533 = scmp.eq.s32.totalorder %s38, 0
      %p534 = por %p532, %p533
      %p535 = scmp.ne.s32.totalorder %s523, %s524
      %p536 = scmp.eq.s32.totalorder %s39, 1
      %p537 = por %p535, %p536
      %p539 = scmp.ne.s32.totalorder %s524, %s538
      %p540 = scmp.eq.s32.totalorder %s39, 0
      %p541 = por %p539, %p540
      %p542 = scmp.le.s32.totalorder 1, %s33
      %p543 = scmp.lt.s32.totalorder %s33, 3
      %p544 = pnand %p542, %p543
      %p545 = pneg %p544
      // Predicated region
      $region9: #{bert_regressor_forward.1} parent=5 // pred_check
        _
      $region10: #{bert_regressor_forward.1} parent=5 // pred_check_branch
        %547 = sbr.rel (%p544) target = $region12
      $region11: #{bert_regressor_forward.1} parent=5 // pred_region
        %s548 = ssub.s32 %s33, 1
        // Predicated region
        $region13: #{bert_regressor_forward.1} parent=11 // pred_check
          %p549 = pneg %p54
        $region14: #{bert_regressor_forward.1} parent=11 // pred_check_branch
          %551 = sbr.rel (%p549) target = $region16
        $region15: #{bert_regressor_forward.1} parent=11 // pred_region
          _
        $region16: #{bert_regressor_forward.1} parent=11 // pred_fallthru
          _
        // Predicated region
        $region17: #{bert_regressor_forward.1} parent=11 // pred_check
          %p552 = pneg %p75
        $region18: #{bert_regressor_forward.1} parent=11 // pred_check_branch
          %554 = sbr.rel (%p552) target = $region20
        $region19: #{bert_regressor_forward.1} parent=11 // pred_region
          _
        $region20: #{bert_regressor_forward.1} parent=11 // pred_fallthru
          _
        // Predicated region
        $region21: #{bert_regressor_forward.1} parent=11 // pred_check
          %p555 = pneg %p96
        $region22: #{bert_regressor_forward.1} parent=11 // pred_check_branch
          %557 = sbr.rel (%p555) target = $region24
        $region23: #{bert_regressor_forward.1} parent=11 // pred_region
          _
        $region24: #{bert_regressor_forward.1} parent=11 // pred_fallthru
          _
        // Predicated region
        $region25: #{bert_regressor_forward.1} parent=11 // pred_check
          %p558 = pneg %p117
        $region26: #{bert_regressor_forward.1} parent=11 // pred_check_branch
          %560 = sbr.rel (%p558) target = $region28
        $region27: #{bert_regressor_forward.1} parent=11 // pred_region
          _
        $region28: #{bert_regressor_forward.1} parent=11 // pred_fallthru
          _
        // Predicated region
        $region29: #{bert_regressor_forward.1} parent=11 // pred_check
          %p561 = pneg %p450
        $region30: #{bert_regressor_forward.1} parent=11 // pred_check_branch
          %563 = sbr.rel (%p561) target = $region32
        $region31: #{bert_regressor_forward.1} parent=11 // pred_region
          _
        $region32: #{bert_regressor_forward.1} parent=11 // pred_fallthru
          _
        // Predicated region
        $region33: #{bert_regressor_forward.1} parent=11 // pred_check
          %p564 = pneg %p471
        $region34: #{bert_regressor_forward.1} parent=11 // pred_check_branch
          %566 = sbr.rel (%p564) target = $region36
        $region35: #{bert_regressor_forward.1} parent=11 // pred_region
          _
        $region36: #{bert_regressor_forward.1} parent=11 // pred_fallthru
          _
        // Predicated region
        $region37: #{bert_regressor_forward.1} parent=11 // pred_check
          %p567 = pneg %p492
        $region38: #{bert_regressor_forward.1} parent=11 // pred_check_branch
          %569 = sbr.rel (%p567) target = $region40
        $region39: #{bert_regressor_forward.1} parent=11 // pred_region
          %s571 = ssub.s32 512, 512
          %572 = vsyncadd [#allocation7], %s571
          %s573 = sshll.u32 [#allocation8], 4
          %s574 = int_to_ptr.vmem [resolvable:$true] %s573
          %579 = dma.hbm_to_vmem [thread:$0]  %s18, 512, %s574, [#allocation7], 128, 128, 8
        $region40: #{bert_regressor_forward.1} parent=11 // pred_fallthru
          _
        // Predicated region
        $region41: #{bert_regressor_forward.1} parent=11 // pred_check
          %p580 = pneg %p513
        $region42: #{bert_regressor_forward.1} parent=11 // pred_check_branch
          %582 = sbr.rel (%p580) target = $region44
        $region43: #{bert_regressor_forward.1} parent=11 // pred_region
          _
        $region44: #{bert_regressor_forward.1} parent=11 // pred_fallthru
          _
      $region12: #{bert_regressor_forward.1} parent=5 // pred_fallthru
        _
      %p583 = scmp.lt.s32.totalorder %s33, 2
      // Predicated region
      $region45: #{bert_regressor_forward.1} parent=5 // pred_check
        %p584 = pneg %p583
      $region46: #{bert_regressor_forward.1} parent=5 // pred_check_branch
        %586 = sbr.rel (%p584) target = $region48
      $region47: #{bert_regressor_forward.1} parent=5 // pred_region
        // Predicated region
        $region49: #{bert_regressor_forward.1} parent=47 // pred_check
          %p587 = pneg %p137
        $region50: #{bert_regressor_forward.1} parent=47 // pred_check_branch
          %589 = sbr.rel (%p587) target = $region52
        $region51: #{bert_regressor_forward.1} parent=47 // pred_region
          %p590 = scmp.lt.s32.totalorder %s33, 1
          %s591 = scalar_select %p590, %s33, 1
          %s592 = smul.addr %s591, 4
          %s593 = smul.addr %s592, 8
          %s594 = scalar_lea.vmem %s4, %s593
        $region52: #{bert_regressor_forward.1} parent=47 // pred_fallthru
          _
        // Predicated region
        $region53: #{bert_regressor_forward.1} parent=47 // pred_check
          %p595 = pneg %p163
        $region54: #{bert_regressor_forward.1} parent=47 // pred_check_branch
          %597 = sbr.rel (%p595) target = $region56
        $region55: #{bert_regressor_forward.1} parent=47 // pred_region
          %p598 = scmp.lt.s32.totalorder %s33, 1
          %s599 = scalar_select %p598, %s33, 1
          %s600 = scalar_lea.vmem %s5, %s599
        $region56: #{bert_regressor_forward.1} parent=47 // pred_fallthru
          _
        // Predicated region
        $region57: #{bert_regressor_forward.1} parent=47 // pred_check
          %p601 = pneg %p189
        $region58: #{bert_regressor_forward.1} parent=47 // pred_check_branch
          %603 = sbr.rel (%p601) target = $region60
        $region59: #{bert_regressor_forward.1} parent=47 // pred_region
          %s604 = sand.u32 %s179, 1
          %s605 = scalar_lea.sflag [#allocation4], %s604
          %s606 = sand.u32 %s179, 1
          %s607 = smul.addr %s606, 32
          %s608 = scalar_lea.vmem [#allocation3], %s607
          %s610 = ssub.s32 512, 512
          %611 = vsyncadd %s605, %s610
          %s612 = smul.addr %s33, 4
          %s613 = smul.addr %s612, 128
          %s614 = scalar_lea.hbm %s6, %s613
          %s615 = sshll.u32 %s608, 4
          %s616 = int_to_ptr.vmem [resolvable:$true] %s615
          %621 = dma.hbm_to_vmem [thread:$0]  %s614, 512, %s616, %s605, 128, 128, 8
        $region60: #{bert_regressor_forward.1} parent=47 // pred_fallthru
          _
        // Predicated region
        $region61: #{bert_regressor_forward.1} parent=47 // pred_check
          %p622 = pneg %p215
        $region62: #{bert_regressor_forward.1} parent=47 // pred_check_branch
          %624 = sbr.rel (%p622) target = $region64
        $region63: #{bert_regressor_forward.1} parent=47 // pred_region
          %p625 = scmp.lt.s32.totalorder %s33, 1
          %s626 = scalar_select %p625, %s33, 1
          %s627 = scalar_lea.vmem %s7, %s626
        $region64: #{bert_regressor_forward.1} parent=47 // pred_fallthru
          _
        // Predicated region
        $region65: #{bert_regressor_forward.1} parent=47 // pred_check
          %p628 = pneg %p241
        $region66: #{bert_regressor_forward.1} parent=47 // pred_check_branch
          %630 = sbr.rel (%p628) target = $region68
        $region67: #{bert_regressor_forward.1} parent=47 // pred_region
          %p631 = scmp.lt.s32.totalorder %s33, 1
          %s632 = scalar_select %p631, %s33, 1
          %s633 = scalar_lea.vmem %s8, %s632
        $region68: #{bert_regressor_forward.1} parent=47 // pred_fallthru
          _
        // Predicated region
        $region69: #{bert_regressor_forward.1} parent=47 // pred_check
          %p634 = pneg %p267
        $region70: #{bert_regressor_forward.1} parent=47 // pred_check_branch
          %636 = sbr.rel (%p634) target = $region72
        $region71: #{bert_regressor_forward.1} parent=47 // pred_region
          %p637 = scmp.lt.s32.totalorder %s33, 1
          %s638 = scalar_select %p637, %s33, 1
          %s639 = scalar_lea.vmem %s9, %s638
        $region72: #{bert_regressor_forward.1} parent=47 // pred_fallthru
          _
        // Predicated region
        $region73: #{bert_regressor_forward.1} parent=47 // pred_check
          %p640 = pneg %p293
        $region74: #{bert_regressor_forward.1} parent=47 // pred_check_branch
          %642 = sbr.rel (%p640) target = $region76
        $region75: #{bert_regressor_forward.1} parent=47 // pred_region
          %s643 = sand.u32 %s33, 1
          %s644 = scalar_lea.sflag [#allocation7], %s643
          %s645 = sand.u32 %s283, 1
          %s646 = smul.addr %s645, 32
          %s647 = scalar_lea.vmem [#allocation6], %s646
          %s649 = ssub.s32 512, 512
          %650 = vsyncadd %s644, %s649
          %s651 = smul.addr %s33, 4
          %s652 = smul.addr %s651, 128
          %s653 = scalar_lea.hbm %s10, %s652
          %s654 = sshll.u32 %s647, 4
          %s655 = int_to_ptr.vmem [resolvable:$true] %s654
          %660 = dma.hbm_to_vmem [thread:$0]  %s653, 512, %s655, %s644, 128, 128, 8
        $region76: #{bert_regressor_forward.1} parent=47 // pred_fallthru
          _
        // Predicated region
        $region77: #{bert_regressor_forward.1} parent=47 // pred_check
          %p661 = pneg %p319
        $region78: #{bert_regressor_forward.1} parent=47 // pred_check_branch
          %663 = sbr.rel (%p661) target = $region80
        $region79: #{bert_regressor_forward.1} parent=47 // pred_region
          %p664 = scmp.lt.s32.totalorder %s33, 1
          %s665 = scalar_select %p664, %s33, 1
          %s666 = scalar_lea.vmem %s11, %s665
        $region80: #{bert_regressor_forward.1} parent=47 // pred_fallthru
          _
        // Predicated region
        $region81: #{bert_regressor_forward.1} parent=47 // pred_check
          %p667 = pneg %p345
        $region82: #{bert_regressor_forward.1} parent=47 // pred_check_branch
          %669 = sbr.rel (%p667) target = $region84
        $region83: #{bert_regressor_forward.1} parent=47 // pred_region
          %p670 = scmp.lt.s32.totalorder %s33, 1
          %s671 = scalar_select %p670, %s33, 1
          %s672 = smul.addr %s671, 8
          %s673 = smul.addr %s672, 8
          %s674 = scalar_lea.vmem %s12, %s673
        $region84: #{bert_regressor_forward.1} parent=47 // pred_fallthru
          _
        // Predicated region
        $region85: #{bert_regressor_forward.1} parent=47 // pred_check
          %p675 = pneg %p371
        $region86: #{bert_regressor_forward.1} parent=47 // pred_check_branch
          %677 = sbr.rel (%p675) target = $region88
        $region87: #{bert_regressor_forward.1} parent=47 // pred_region
          %p678 = scmp.lt.s32.totalorder %s33, 1
          %s679 = scalar_select %p678, %s33, 1
          %s680 = scalar_lea.vmem %s13, %s679
        $region88: #{bert_regressor_forward.1} parent=47 // pred_fallthru
          _
        // Predicated region
        $region89: #{bert_regressor_forward.1} parent=47 // pred_check
          %p681 = pneg %p397
        $region90: #{bert_regressor_forward.1} parent=47 // pred_check_branch
          %683 = sbr.rel (%p681) target = $region92
        $region91: #{bert_regressor_forward.1} parent=47 // pred_region
          %p684 = scmp.lt.s32.totalorder %s33, 1
          %s685 = scalar_select %p684, %s33, 1
          %s686 = scalar_lea.vmem %s14, %s685
        $region92: #{bert_regressor_forward.1} parent=47 // pred_fallthru
          _
        // Predicated region
        $region93: #{bert_regressor_forward.1} parent=47 // pred_check
          %p687 = pneg %p423
        $region94: #{bert_regressor_forward.1} parent=47 // pred_check_branch
          %689 = sbr.rel (%p687) target = $region96
        $region95: #{bert_regressor_forward.1} parent=47 // pred_region
          %p690 = scmp.lt.s32.totalorder %s33, 1
          %s691 = scalar_select %p690, %s33, 1
          %s692 = scalar_lea.vmem %s15, %s691
        $region96: #{bert_regressor_forward.1} parent=47 // pred_fallthru
          _
      $region48: #{bert_regressor_forward.1} parent=5 // pred_fallthru
        _
      %p693 = scmp.le.s32.totalorder 1, %s33
      %p694 = scmp.lt.s32.totalorder %s33, 3
      %p695 = pnand %p693, %p694
      %p696 = pneg %p695
      // Predicated region
      $region97: #{bert_regressor_forward.1} parent=5 // pred_check
        _
      $region98: #{bert_regressor_forward.1} parent=5 // pred_check_branch
        %698 = sbr.rel (%p695) target = $region100
      $region99: #{bert_regressor_forward.1} parent=5 // pred_region
        %s699 = ssub.s32 %s33, 1
        %s700 = sand.u32 %s182, 1
        %s701 = scalar_lea.sflag [#allocation4], %s700
        %s702 = sand.u32 %s182, 1
        %s703 = smul.addr %s702, 32
        %s704 = scalar_lea.vmem [#allocation3], %s703
        // Predicated region
        $region101: #{bert_regressor_forward.1} parent=99 // pred_check
          %p705 = pneg %p195
        $region102: #{bert_regressor_forward.1} parent=99 // pred_check_branch
          %707 = sbr.rel (%p705) target = $region104
        $region103: #{bert_regressor_forward.1} parent=99 // pred_region
          %708 = dma.done %s701, 512
        $region104: #{bert_regressor_forward.1} parent=99 // pred_fallthru
          _
        %s709 = sand.u32 %s38, 1
        %s710 = scalar_lea.sflag [#allocation7], %s709
        %s711 = sand.u32 %s286, 1
        %s712 = smul.addr %s711, 32
        %s713 = scalar_lea.vmem [#allocation6], %s712
        // Predicated region
        $region105: #{bert_regressor_forward.1} parent=99 // pred_check
          %p714 = pneg %p299
        $region106: #{bert_regressor_forward.1} parent=99 // pred_check_branch
          %716 = sbr.rel (%p714) target = $region108
        $region107: #{bert_regressor_forward.1} parent=99 // pred_region
          %717 = dma.done %s710, 512
        $region108: #{bert_regressor_forward.1} parent=99 // pred_fallthru
          _
        // Predicated region
        $region109: #{bert_regressor_forward.1} parent=99 // pred_check
          %p718 = pneg %p492
        $region110: #{bert_regressor_forward.1} parent=99 // pred_check_branch
          %720 = sbr.rel (%p718) target = $region112
        $region111: #{bert_regressor_forward.1} parent=99 // pred_region
          %721 = dma.done [#allocation7], 512
        $region112: #{bert_regressor_forward.1} parent=99 // pred_fallthru
          _
        %p722 = pneg %p54
        %p723 = pneg %p51
        %p724 = pneg %p75
        %p725 = pneg %p72
        %p726 = pneg %p96
        %p727 = pneg %p93
        %p728 = pneg %p117
        %p729 = pneg %p114
        %p730 = scmp.lt.s32.totalorder %s38, 1
        %s731 = scalar_select %p730, %s38, 1
        %s732 = smul.addr %s731, 4
        %s733 = smul.addr %s732, 8
        %s734 = scalar_lea.vmem %s4, %s733
        %p735 = pneg %p143
        %p736 = pneg %p140
        %p737 = scmp.lt.s32.totalorder %s38, 1
        %s738 = scalar_select %p737, %s38, 1
        %s739 = scalar_lea.vmem %s5, %s738
        %p740 = pneg %p169
        %p741 = pneg %p166
        %s742 = sand.u32 %s182, 1
        %s743 = scalar_lea.sflag [#allocation4], %s742
        %s744 = sand.u32 %s182, 1
        %s745 = smul.addr %s744, 32
        %s746 = scalar_lea.vmem [#allocation3], %s745
        %p747 = pneg %p195
        %p748 = pneg %p192
        %p749 = scmp.lt.s32.totalorder %s38, 1
        %s750 = scalar_select %p749, %s38, 1
        %s751 = scalar_lea.vmem %s7, %s750
        %p752 = pneg %p221
        %p753 = pneg %p218
        %p754 = scmp.lt.s32.totalorder %s38, 1
        %s755 = scalar_select %p754, %s38, 1
        %s756 = scalar_lea.vmem %s8, %s755
        %p757 = pneg %p247
        %p758 = pneg %p244
        %p759 = scmp.lt.s32.totalorder %s38, 1
        %s760 = scalar_select %p759, %s38, 1
        %s761 = scalar_lea.vmem %s9, %s760
        %p762 = pneg %p273
        %p763 = pneg %p270
        %s764 = sand.u32 %s38, 1
        %s765 = scalar_lea.sflag [#allocation7], %s764
        %s766 = sand.u32 %s286, 1
        %s767 = smul.addr %s766, 32
        %s768 = scalar_lea.vmem [#allocation6], %s767
        %p769 = pneg %p299
        %p770 = pneg %p296
        %p771 = scmp.lt.s32.totalorder %s38, 1
        %s772 = scalar_select %p771, %s38, 1
        %s773 = scalar_lea.vmem %s11, %s772
        %p774 = pneg %p325
        %p775 = pneg %p322
        %p776 = scmp.lt.s32.totalorder %s38, 1
        %s777 = scalar_select %p776, %s38, 1
        %s778 = smul.addr %s777, 8
        %s779 = smul.addr %s778, 8
        %s780 = scalar_lea.vmem %s12, %s779
        %p781 = pneg %p351
        %p782 = pneg %p348
        %p783 = scmp.lt.s32.totalorder %s38, 1
        %s784 = scalar_select %p783, %s38, 1
        %s785 = scalar_lea.vmem %s13, %s784
        %p786 = pneg %p377
        %p787 = pneg %p374
        %p788 = scmp.lt.s32.totalorder %s38, 1
        %s789 = scalar_select %p788, %s38, 1
        %s790 = scalar_lea.vmem %s14, %s789
        %p791 = pneg %p403
        %p792 = pneg %p400
        %p793 = scmp.lt.s32.totalorder %s38, 1
        %s794 = scalar_select %p793, %s38, 1
        %s795 = scalar_lea.vmem %s15, %s794
        %p796 = pneg %p429
        %p797 = pneg %p426
        %p798 = pneg %p450
        %p799 = pneg %p447
        %p800 = pneg %p471
        %p801 = pneg %p468
        %p802 = pneg %p492
        %p803 = pneg %p489
        %p804 = pneg %p513
        %p805 = pneg %p510
        %p806 = pneg %p534
        %p807 = pneg %p531
        %p808 = scmp.lt.s32.totalorder %s38, 1
        %s809 = scalar_select %p808, %s38, 1
        %s810 = smul.addr %s809, 4
        %s811 = smul.addr %s810, 8
        %s812 = scalar_lea.vmem %s4, %s811
        %p813 = scmp.lt.s32.totalorder %s38, 1
        %s814 = scalar_select %p813, %s38, 1
        %s815 = scalar_lea.vmem %s5, %s814
        %p816 = scmp.lt.s32.totalorder %s38, 1
        %s817 = scalar_select %p816, %s38, 1
        %s818 = scalar_lea.vmem %s7, %s817
        %p819 = scmp.lt.s32.totalorder %s38, 1
        %s820 = scalar_select %p819, %s38, 1
        %s821 = scalar_lea.vmem %s8, %s820
        %p822 = scmp.lt.s32.totalorder %s38, 1
        %s823 = scalar_select %p822, %s38, 1
        %s824 = scalar_lea.vmem %s9, %s823
        %p825 = scmp.lt.s32.totalorder %s38, 1
        %s826 = scalar_select %p825, %s38, 1
        %s827 = scalar_lea.vmem %s11, %s826
        %p828 = scmp.lt.s32.totalorder %s38, 1
        %s829 = scalar_select %p828, %s38, 1
        %s830 = smul.addr %s829, 8
        %s831 = smul.addr %s830, 8
        %s832 = scalar_lea.vmem %s12, %s831
        %p833 = scmp.lt.s32.totalorder %s38, 1
        %s834 = scalar_select %p833, %s38, 1
        %s835 = scalar_lea.vmem %s13, %s834
        %p836 = scmp.lt.s32.totalorder %s38, 1
        %s837 = scalar_select %p836, %s38, 1
        %s838 = scalar_lea.vmem %s14, %s837
        %p839 = scmp.lt.s32.totalorder %s38, 1
        %s840 = scalar_select %p839, %s38, 1
        %s841 = scalar_lea.vmem %s15, %s840
        %p842 = scmp.eq.s32.totalorder %s38, 0
        // Predicated region
        $region113: #{bert_regressor_forward.1} parent=99 // pred_check
          %p843 = pneg %p842
        $region114: #{bert_regressor_forward.1} parent=99 // pred_check_branch
          %845 = sbr.rel (%p843) target = $region116
        $region115: #{bert_regressor_forward.1} parent=99 // pred_region
          %v846 = vld [vmem:[%s0] sm:$0xff]
          %v847 = vld [vmem:[%s0 + $0x8] sm:$0xff]
          %v848 = vld [vmem:[%s2] sm:$0x1]
          %v849 = vld [vmem:[%s3] sm:$0x1]
          %vm850 = vcmask 261120
          %v851 = vsel %vm850, %v846, 0.0
          %852 = vadd.xlane.f32.xlu0 %v851
          %v853 = vpop.xlane.xlu0 %852
          %v854 = vsel %vm850, %v847, 0.0
          %855 = vadd.xlane.f32.xlu0 %v854
          %v856 = vpop.xlane.xlu0 %855
          %v857 = vrcp.pop 32.0
          %v858 = vmul.f32 %v853, %v857
          %v859 = vmul.f32 %v856, %v857
          %v860 = vsub.f32 %v846, %v858
          %v861 = vsub.f32 %v847, %v859
          %v862 = vmul.f32 %v860, %v860
          %v863 = vmul.f32 %v861, %v861
          %v864 = vsel %vm850, %v862, 0.0
          %865 = vadd.xlane.f32.xlu0 %v864
          %v866 = vpop.xlane.xlu0 %865
          %v867 = vsel %vm850, %v863, 0.0
          %868 = vadd.xlane.f32.xlu0 %v867
          %v869 = vpop.xlane.xlu0 %868
          %v870 = vmul.f32 %v866, %v857
          %v871 = vmul.f32 %v869, %v857
          %v872 = vadd.f32 %v870, 1e-12
          %v873 = vadd.f32 %v871, 1e-12
          %v874 = vrsqrt.pop %v872
          %v875 = vrsqrt.pop %v873
          %v876 = vmul.f32 %v860, %v874
          %v877 = vmul.f32 %v861, %v875
          %v879 = vlaneseq
          %v880 = vshrl.u32 %v879, 7
          %v881 = vsub.s32 0, %v880
          %v882 = vrot.slane %v848, %v881
          %v884 = vmul.f32 %v876, %v882
          %v885 = vmul.f32 %v877, %v882
          %v887 = vlaneseq
          %v888 = vshrl.u32 %v887, 7
          %v889 = vsub.s32 0, %v888
          %v890 = vrot.slane %v849, %v889
          %v892 = vadd.f32 %v884, %v890
          %v893 = vadd.f32 %v885, %v890
          %894 = vst.msk [vmem:[#allocation2] sm:$0xff] %vm850, %v892
          %895 = vst.msk [vmem:[#allocation2 + $0x8] sm:$0xff] %vm850, %v893
        $region116: #{bert_regressor_forward.1} parent=99 // pred_fallthru
          _
        %v896 = vld [vmem:[#allocation2] sm:$0xff]
        %v897 = vld [vmem:[#allocation2 + $0x8] sm:$0xff]
        %v898 = vld [vmem:[%s812] sm:$0xff]
        %v899 = vld [vmem:[%s812 + $0x8] sm:$0xff]
        %v900 = vld [vmem:[%s812 + $0x10] sm:$0xff]
        %v901 = vld [vmem:[%s812 + $0x18] sm:$0xff]
        %v902 = vld [vmem:[%s815] sm:$0x1]
        %v904 = vlaneseq
        %v905 = vshrl.u32 %v904, 7
        %v906 = vsub.s32 0, %v905
        %v907 = vrot.slane %v902, %v906
        %vm909 = vcmask 261120
        %v911 = vsel %vm909, %v896, 0
        %v914 = vsel %vm909, %v897, 0
        %916 = vmatprep.subr.mxu0 0.0
        %917 = vmatpush1.msra.mxu0 0.0
        %918 = vmatprep.subr.mxu0 0.0
        %919 = vmatpush1.msra.mxu0 0.0
        %920 = vmatprep.subr.mxu0 0.0
        %921 = vmatpush1.msra.mxu0 0.0
        %922 = vmatprep.subr.mxu0 0.0
        %923 = vmatpush1.msra.mxu0 0.0
        %924 = vmatprep.subr.mxu0 0.0
        %925 = vmatpush1.msra.mxu0 0.0
        %926 = vmatprep.subr.mxu0 0.0
        %927 = vmatpush1.msra.mxu0 0.0
        %928 = vmatprep.subr.mxu0 0.0
        %929 = vmatpush1.msra.mxu0 0.0
        %930 = vmatprep.subr.mxu0 0.0
        %931 = vmatpush1.msra.mxu0 0.0
        %932 = vmatprep.subr.mxu0 0.0
        %933 = vmatpush1.msra.mxu0 0.0
        %934 = vmatprep.subr.mxu0 0.0
        %935 = vmatpush1.msra.mxu0 0.0
        %936 = vmatprep.subr.mxu0 0.0
        %937 = vmatpush1.msra.mxu0 0.0
        %938 = vmatprep.subr.mxu0 0.0
        %939 = vmatpush1.msra.mxu0 0.0
        %940 = vmatprep.subr.mxu0 0.0
        %941 = vmatpush1.msra.mxu0 %v901
        %942 = vmatprep.subr.mxu0 0.0
        %943 = vmatpush1.msra.mxu0 %v900
        %944 = vmatprep.subr.mxu0 0.0
        %945 = vmatpush1.msra.mxu0 %v899
        %946 = vmatprep.subr.mxu0 0.0
        %947 = vmatpush1.msra.mxu0 %v898
        %948 = vmatprep.subr.mxu0 0.0
        %949 = vmatpush2.msra.mxu0 0.0
        %950 = vmatprep.subr.mxu0 0.0
        %951 = vmatpush2.msra.mxu0 0.0
        %952 = vmatprep.subr.mxu0 0.0
        %953 = vmatpush2.msra.mxu0 0.0
        %954 = vmatprep.subr.mxu0 0.0
        %955 = vmatpush2.msra.mxu0 0.0
        %956 = vmatprep.subr.mxu0 0.0
        %957 = vmatpush2.msra.mxu0 0.0
        %958 = vmatprep.subr.mxu0 0.0
        %959 = vmatpush2.msra.mxu0 0.0
        %960 = vmatprep.subr.mxu0 0.0
        %961 = vmatpush2.msra.mxu0 0.0
        %962 = vmatprep.subr.mxu0 0.0
        %963 = vmatpush2.msra.mxu0 0.0
        %964 = vmatprep.subr.mxu0 0.0
        %965 = vmatpush2.msra.mxu0 0.0
        %966 = vmatprep.subr.mxu0 0.0
        %967 = vmatpush2.msra.mxu0 0.0
        %968 = vmatprep.subr.mxu0 0.0
        %969 = vmatpush2.msra.mxu0 0.0
        %970 = vmatprep.subr.mxu0 0.0
        %971 = vmatpush2.msra.mxu0 0.0
        %972 = vmatprep.subr.mxu0 0.0
        %973 = vmatpush2.msra.mxu0 0.0
        %974 = vmatprep.subr.mxu0 0.0
        %975 = vmatpush2.msra.mxu0 0.0
        %976 = vmatprep.subr.mxu0 0.0
        %977 = vmatpush2.msra.mxu0 0.0
        %978 = vmatprep.subr.mxu0 0.0
        %979 = vmatpush2.msra.mxu0 0.0
        %980 = vmatprep.mubr.f32.mxu0 0.0
        %981 = vmatmul.mubr.f32.gmra.mxu0 %v911
        %v982 = vpop.f32.mrf.mxu0
        %v983 = vadd.f32 %v907, %v982
        %v984 = vpop.f32.mrf.mxu0
        %985 = vmatprep.mubr.f32.mxu0 0.0
        %986 = vmatmul.mubr.f32.gmra.mxu0 %v914
        %v987 = vpop.f32.mrf.mxu0
        %v988 = vadd.f32 %v907, %v987
        %v989 = vpop.f32.mrf.mxu0
        %990 = vdwg.mxu0
        %v991 = vld [vmem:[%s1] sm:$0x3]
        %v992 = vsub.f32 1.0, %v991
        %v993 = vmul.f32 %v992, -1e+09
        %v996 = vunpack.c.l.s4 1966171168
        %v997 = vunpack.c.0.s8 %v996
        %v998 = vlaneseq
        %v999 = vshrl.u32 %v998, 7
        %v1000 = vsub.s32 %v997, %v999
        %v1001 = vrot.slane %v993, %v1000
        %v1002 = vcombine.high %v1001, %v1001
        %v1004 = vunpack.c.l.s4 1966171168
        %v1005 = vunpack.c.0.s8 %v1004
        %v1006 = vlaneseq
        %v1007 = vshrl.u32 %v1006, 7
        %v1008 = vsub.s32 %v1005, %v1007
        %v1009 = vrot.slane %v1001, %v1008
        %v1011 = vunpack.c.l.s4 1966171168
        %v1012 = vunpack.c.0.s8 %v1011
        %v1013 = vlaneseq
        %v1014 = vshrl.u32 %v1013, 7
        %v1015 = vsub.s32 %v1012, %v1014
        %v1016 = vrot.slane %v1002, %v1015
        %1018 = vrot.lane.b32.xlu0 %v983, 96
        %v1019 = vpop.permute.xlu0 %1018
        %vm1020 = vcmask 130048
        %v1021 = vsel %vm1020, %v983, 0
        %v1023 = vsel %vm1020, %v1019, 0
        %1025 = vmatprep.subr.mxu0 0.0
        %1026 = vmatpush1.xpose.msra.mxu0 0.0
        %1027 = vmatprep.subr.mxu0 0.0
        %1028 = vmatpush1.xpose.msra.mxu0 0.0
        %1029 = vmatprep.subr.mxu0 0.0
        %1030 = vmatpush1.xpose.msra.mxu0 0.0
        %1031 = vmatprep.subr.mxu0 0.0
        %1032 = vmatpush1.xpose.msra.mxu0 0.0
        %1033 = vmatprep.subr.mxu0 0.0
        %1034 = vmatpush1.xpose.msra.mxu0 0.0
        %1035 = vmatprep.subr.mxu0 0.0
        %1036 = vmatpush1.xpose.msra.mxu0 0.0
        %1037 = vmatprep.subr.mxu0 0.0
        %1038 = vmatpush1.xpose.msra.mxu0 0.0
        %1039 = vmatprep.subr.mxu0 0.0
        %1040 = vmatpush1.xpose.msra.mxu0 0.0
        %1041 = vmatprep.subr.mxu0 0.0
        %1042 = vmatpush1.xpose.msra.mxu0 0.0
        %1043 = vmatprep.subr.mxu0 0.0
        %1044 = vmatpush1.xpose.msra.mxu0 0.0
        %1045 = vmatprep.subr.mxu0 0.0
        %1046 = vmatpush1.xpose.msra.mxu0 0.0
        %1047 = vmatprep.subr.mxu0 0.0
        %1048 = vmatpush1.xpose.msra.mxu0 0.0
        %1049 = vmatprep.subr.mxu0 0.0
        %1050 = vmatpush1.xpose.msra.mxu0 0.0
        %1051 = vmatprep.subr.mxu0 0.0
        %1052 = vmatpush1.xpose.msra.mxu0 0.0
        %1053 = vmatprep.subr.mxu0 0.0
        %1054 = vmatpush1.xpose.msra.mxu0 0.0
        %1055 = vmatprep.subr.mxu0 0.0
        %1056 = vmatpush1.xpose.msra.mxu0 %v1023
        %1057 = vmatprep.subr.mxu0 0.0
        %1058 = vmatpush2.xpose.msra.mxu0 0.0
        %1059 = vmatprep.subr.mxu0 0.0
        %1060 = vmatpush2.xpose.msra.mxu0 0.0
        %1061 = vmatprep.subr.mxu0 0.0
        %1062 = vmatpush2.xpose.msra.mxu0 0.0
        %1063 = vmatprep.subr.mxu0 0.0
        %1064 = vmatpush2.xpose.msra.mxu0 0.0
        %1065 = vmatprep.subr.mxu0 0.0
        %1066 = vmatpush2.xpose.msra.mxu0 0.0
        %1067 = vmatprep.subr.mxu0 0.0
        %1068 = vmatpush2.xpose.msra.mxu0 0.0
        %1069 = vmatprep.subr.mxu0 0.0
        %1070 = vmatpush2.xpose.msra.mxu0 0.0
        %1071 = vmatprep.subr.mxu0 0.0
        %1072 = vmatpush2.xpose.msra.mxu0 0.0
        %1073 = vmatprep.subr.mxu0 0.0
        %1074 = vmatpush2.xpose.msra.mxu0 0.0
        %1075 = vmatprep.subr.mxu0 0.0
        %1076 = vmatpush2.xpose.msra.mxu0 0.0
        %1077 = vmatprep.subr.mxu0 0.0
        %1078 = vmatpush2.xpose.msra.mxu0 0.0
        %1079 = vmatprep.subr.mxu0 0.0
        %1080 = vmatpush2.xpose.msra.mxu0 0.0
        %1081 = vmatprep.subr.mxu0 0.0
        %1082 = vmatpush2.xpose.msra.mxu0 0.0
        %1083 = vmatprep.subr.mxu0 0.0
        %1084 = vmatpush2.xpose.msra.mxu0 0.0
        %1085 = vmatprep.subr.mxu0 0.0
        %1086 = vmatpush2.xpose.msra.mxu0 0.0
        %1087 = vmatprep.subr.mxu0 0.0
        %1088 = vmatpush2.xpose.msra.mxu0 0.0
        %1089 = vmatprep.mubr.f32.mxu0 0.0
        %1090 = vmatmul.mubr.f32.gmra.mxu0 %v1021
        %v1091 = vpop.f32.mrf.mxu0
        %v1092 = vadd.f32 0.0, %v1091
        %v1093 = vpop.f32.mrf.mxu0
        %1094 = vdwg.mxu0
        %1096 = vrot.lane.b32.xlu0 %v988, 96
        %v1097 = vpop.permute.xlu0 %1096
        %v1098 = vsel %vm1020, %v988, 0
        %v1100 = vsel %vm1020, %v1097, 0
        %1102 = vmatprep.subr.mxu0 0.0
        %1103 = vmatpush1.xpose.msra.mxu0 0.0
        %1104 = vmatprep.subr.mxu0 0.0
        %1105 = vmatpush1.xpose.msra.mxu0 0.0
        %1106 = vmatprep.subr.mxu0 0.0
        %1107 = vmatpush1.xpose.msra.mxu0 0.0
        %1108 = vmatprep.subr.mxu0 0.0
        %1109 = vmatpush1.xpose.msra.mxu0 0.0
        %1110 = vmatprep.subr.mxu0 0.0
        %1111 = vmatpush1.xpose.msra.mxu0 0.0
        %1112 = vmatprep.subr.mxu0 0.0
        %1113 = vmatpush1.xpose.msra.mxu0 0.0
        %1114 = vmatprep.subr.mxu0 0.0
        %1115 = vmatpush1.xpose.msra.mxu0 0.0
        %1116 = vmatprep.subr.mxu0 0.0
        %1117 = vmatpush1.xpose.msra.mxu0 0.0
        %1118 = vmatprep.subr.mxu0 0.0
        %1119 = vmatpush1.xpose.msra.mxu0 0.0
        %1120 = vmatprep.subr.mxu0 0.0
        %1121 = vmatpush1.xpose.msra.mxu0 0.0
        %1122 = vmatprep.subr.mxu0 0.0
        %1123 = vmatpush1.xpose.msra.mxu0 0.0
        %1124 = vmatprep.subr.mxu0 0.0
        %1125 = vmatpush1.xpose.msra.mxu0 0.0
        %1126 = vmatprep.subr.mxu0 0.0
        %1127 = vmatpush1.xpose.msra.mxu0 0.0
        %1128 = vmatprep.subr.mxu0 0.0
        %1129 = vmatpush1.xpose.msra.mxu0 0.0
        %1130 = vmatprep.subr.mxu0 0.0
        %1131 = vmatpush1.xpose.msra.mxu0 0.0
        %1132 = vmatprep.subr.mxu0 0.0
        %1133 = vmatpush1.xpose.msra.mxu0 %v1100
        %1134 = vmatprep.subr.mxu0 0.0
        %1135 = vmatpush2.xpose.msra.mxu0 0.0
        %1136 = vmatprep.subr.mxu0 0.0
        %1137 = vmatpush2.xpose.msra.mxu0 0.0
        %1138 = vmatprep.subr.mxu0 0.0
        %1139 = vmatpush2.xpose.msra.mxu0 0.0
        %1140 = vmatprep.subr.mxu0 0.0
        %1141 = vmatpush2.xpose.msra.mxu0 0.0
        %1142 = vmatprep.subr.mxu0 0.0
        %1143 = vmatpush2.xpose.msra.mxu0 0.0
        %1144 = vmatprep.subr.mxu0 0.0
        %1145 = vmatpush2.xpose.msra.mxu0 0.0
        %1146 = vmatprep.subr.mxu0 0.0
        %1147 = vmatpush2.xpose.msra.mxu0 0.0
        %1148 = vmatprep.subr.mxu0 0.0
        %1149 = vmatpush2.xpose.msra.mxu0 0.0
        %1150 = vmatprep.subr.mxu0 0.0
        %1151 = vmatpush2.xpose.msra.mxu0 0.0
        %1152 = vmatprep.subr.mxu0 0.0
        %1153 = vmatpush2.xpose.msra.mxu0 0.0
        %1154 = vmatprep.subr.mxu0 0.0
        %1155 = vmatpush2.xpose.msra.mxu0 0.0
        %1156 = vmatprep.subr.mxu0 0.0
        %1157 = vmatpush2.xpose.msra.mxu0 0.0
        %1158 = vmatprep.subr.mxu0 0.0
        %1159 = vmatpush2.xpose.msra.mxu0 0.0
        %1160 = vmatprep.subr.mxu0 0.0
        %1161 = vmatpush2.xpose.msra.mxu0 0.0
        %1162 = vmatprep.subr.mxu0 0.0
        %1163 = vmatpush2.xpose.msra.mxu0 0.0
        %1164 = vmatprep.subr.mxu0 0.0
        %1165 = vmatpush2.xpose.msra.mxu0 0.0
        %1166 = vmatprep.mubr.f32.mxu0 0.0
        %1167 = vmatmul.mubr.f32.gmra.mxu0 %v1098
        %v1168 = vpop.f32.mrf.mxu0
        %v1169 = vadd.f32 0.0, %v1168
        %v1170 = vpop.f32.mrf.mxu0
        %1171 = vdwg.mxu0
        %v1172 = vmul.f32 %v1092, 0.25
        %v1173 = vmul.f32 %v1169, 0.25
        %v1174 = vlaneseq
        %v1175 = vshrl.u32 %v1174, 7
        %v1176 = vsub.s32 0, %v1175
        %v1177 = vrot.slane %v1009, %v1176
        %v1178 = vlaneseq
        %v1179 = vshrl.u32 %v1178, 7
        %v1180 = vsub.s32 0, %v1179
        %v1181 = vrot.slane %v1016, %v1180
        %v1184 = vadd.f32 %v1172, %v1177
        %v1185 = vadd.f32 %v1173, %v1181
        %vm1186 = vcmask 64512
        %v1187 = vsel %vm1186, %v1184, -inf
        %1188 = vmax.xlane.f32.xlu0 %v1187
        %v1189 = vpop.xlane.xlu0 %1188
        %v1190 = vsel %vm1186, %v1185, -inf
        %1191 = vmax.xlane.f32.xlu0 %v1190
        %v1192 = vpop.xlane.xlu0 %1191
        %v1193 = vsub.f32 %v1184, %v1189
        %v1194 = vsub.f32 %v1185, %v1192
        %v1195 = vmul.f32 %v1193, 1.442695
        %v1196 = vpow.pop %v1195
        %v1197 = vmul.f32 %v1194, 1.442695
        %v1198 = vpow.pop %v1197
        %v1199 = vsel %vm1186, %v1196, 0.0
        %1200 = vadd.xlane.f32.xlu0 %v1199
        %v1201 = vpop.xlane.xlu0 %1200
        %v1202 = vsel %vm1186, %v1198, 0.0
        %1203 = vadd.xlane.f32.xlu0 %v1202
        %v1204 = vpop.xlane.xlu0 %1203
        %v1205 = vrcp.pop %v1201
        %v1206 = vrcp.pop %v1204
        %v1207 = vmul.f32 %v1196, %v1205
        %v1208 = vmul.f32 %v1198, %v1206
        %1209 = vrot.lane.b32.xlu0 %v983, 64
        %v1210 = vpop.permute.xlu0 %1209
        %v1213 = vsel %vm1186, %v1207, 0
        %1215 = vmatprep.subr.mxu0 0.0
        %1216 = vmatpush1.msra.mxu0 0.0
        %1217 = vmatprep.subr.mxu0 0.0
        %1218 = vmatpush1.msra.mxu0 0.0
        %1219 = vmatprep.subr.mxu0 0.0
        %1220 = vmatpush1.msra.mxu0 0.0
        %1221 = vmatprep.subr.mxu0 0.0
        %1222 = vmatpush1.msra.mxu0 0.0
        %1223 = vmatprep.subr.mxu0 0.0
        %1224 = vmatpush1.msra.mxu0 0.0
        %1225 = vmatprep.subr.mxu0 0.0
        %1226 = vmatpush1.msra.mxu0 0.0
        %1227 = vmatprep.subr.mxu0 0.0
        %1228 = vmatpush1.msra.mxu0 0.0
        %1229 = vmatprep.subr.mxu0 0.0
        %1230 = vmatpush1.msra.mxu0 0.0
        %1231 = vmatprep.subr.mxu0 0.0
        %1232 = vmatpush1.msra.mxu0 0.0
        %1233 = vmatprep.subr.mxu0 0.0
        %1234 = vmatpush1.msra.mxu0 0.0
        %1235 = vmatprep.subr.mxu0 0.0
        %1236 = vmatpush1.msra.mxu0 0.0
        %1237 = vmatprep.subr.mxu0 0.0
        %1238 = vmatpush1.msra.mxu0 0.0
        %1239 = vmatprep.subr.mxu0 0.0
        %1240 = vmatpush1.msra.mxu0 0.0
        %1241 = vmatprep.subr.mxu0 0.0
        %1242 = vmatpush1.msra.mxu0 0.0
        %1243 = vmatprep.subr.mxu0 0.0
        %1244 = vmatpush1.msra.mxu0 0.0
        %1245 = vmatprep.subr.mxu0 0.0
        %1246 = vmatpush1.msra.mxu0 %v1210
        %1247 = vmatprep.subr.mxu0 0.0
        %1248 = vmatpush2.msra.mxu0 0.0
        %1249 = vmatprep.subr.mxu0 0.0
        %1250 = vmatpush2.msra.mxu0 0.0
        %1251 = vmatprep.subr.mxu0 0.0
        %1252 = vmatpush2.msra.mxu0 0.0
        %1253 = vmatprep.subr.mxu0 0.0
        %1254 = vmatpush2.msra.mxu0 0.0
        %1255 = vmatprep.subr.mxu0 0.0
        %1256 = vmatpush2.msra.mxu0 0.0
        %1257 = vmatprep.subr.mxu0 0.0
        %1258 = vmatpush2.msra.mxu0 0.0
        %1259 = vmatprep.subr.mxu0 0.0
        %1260 = vmatpush2.msra.mxu0 0.0
        %1261 = vmatprep.subr.mxu0 0.0
        %1262 = vmatpush2.msra.mxu0 0.0
        %1263 = vmatprep.subr.mxu0 0.0
        %1264 = vmatpush2.msra.mxu0 0.0
        %1265 = vmatprep.subr.mxu0 0.0
        %1266 = vmatpush2.msra.mxu0 0.0
        %1267 = vmatprep.subr.mxu0 0.0
        %1268 = vmatpush2.msra.mxu0 0.0
        %1269 = vmatprep.subr.mxu0 0.0
        %1270 = vmatpush2.msra.mxu0 0.0
        %1271 = vmatprep.subr.mxu0 0.0
        %1272 = vmatpush2.msra.mxu0 0.0
        %1273 = vmatprep.subr.mxu0 0.0
        %1274 = vmatpush2.msra.mxu0 0.0
        %1275 = vmatprep.subr.mxu0 0.0
        %1276 = vmatpush2.msra.mxu0 0.0
        %1277 = vmatprep.subr.mxu0 0.0
        %1278 = vmatpush2.msra.mxu0 0.0
        %1279 = vmatprep.mubr.f32.mxu0 0.0
        %1280 = vmatmul.mubr.f32.gmra.mxu0 %v1213
        %v1281 = vpop.f32.mrf.mxu0
        %v1282 = vadd.f32 0.0, %v1281
        %v1283 = vpop.f32.mrf.mxu0
        %1284 = vdwg.mxu0
        %1285 = vrot.lane.b32.xlu0 %v988, 64
        %v1286 = vpop.permute.xlu0 %1285
        %v1289 = vsel %vm1186, %v1208, 0
        %1291 = vmatprep.subr.mxu0 0.0
        %1292 = vmatpush1.msra.mxu0 0.0
        %1293 = vmatprep.subr.mxu0 0.0
        %1294 = vmatpush1.msra.mxu0 0.0
        %1295 = vmatprep.subr.mxu0 0.0
        %1296 = vmatpush1.msra.mxu0 0.0
        %1297 = vmatprep.subr.mxu0 0.0
        %1298 = vmatpush1.msra.mxu0 0.0
        %1299 = vmatprep.subr.mxu0 0.0
        %1300 = vmatpush1.msra.mxu0 0.0
        %1301 = vmatprep.subr.mxu0 0.0
        %1302 = vmatpush1.msra.mxu0 0.0
        %1303 = vmatprep.subr.mxu0 0.0
        %1304 = vmatpush1.msra.mxu0 0.0
        %1305 = vmatprep.subr.mxu0 0.0
        %1306 = vmatpush1.msra.mxu0 0.0
        %1307 = vmatprep.subr.mxu0 0.0
        %1308 = vmatpush1.msra.mxu0 0.0
        %1309 = vmatprep.subr.mxu0 0.0
        %1310 = vmatpush1.msra.mxu0 0.0
        %1311 = vmatprep.subr.mxu0 0.0
        %1312 = vmatpush1.msra.mxu0 0.0
        %1313 = vmatprep.subr.mxu0 0.0
        %1314 = vmatpush1.msra.mxu0 0.0
        %1315 = vmatprep.subr.mxu0 0.0
        %1316 = vmatpush1.msra.mxu0 0.0
        %1317 = vmatprep.subr.mxu0 0.0
        %1318 = vmatpush1.msra.mxu0 0.0
        %1319 = vmatprep.subr.mxu0 0.0
        %1320 = vmatpush1.msra.mxu0 0.0
        %1321 = vmatprep.subr.mxu0 0.0
        %1322 = vmatpush1.msra.mxu0 %v1286
        %1323 = vmatprep.subr.mxu0 0.0
        %1324 = vmatpush2.msra.mxu0 0.0
        %1325 = vmatprep.subr.mxu0 0.0
        %1326 = vmatpush2.msra.mxu0 0.0
        %1327 = vmatprep.subr.mxu0 0.0
        %1328 = vmatpush2.msra.mxu0 0.0
        %1329 = vmatprep.subr.mxu0 0.0
        %1330 = vmatpush2.msra.mxu0 0.0
        %1331 = vmatprep.subr.mxu0 0.0
        %1332 = vmatpush2.msra.mxu0 0.0
        %1333 = vmatprep.subr.mxu0 0.0
        %1334 = vmatpush2.msra.mxu0 0.0
        %1335 = vmatprep.subr.mxu0 0.0
        %1336 = vmatpush2.msra.mxu0 0.0
        %1337 = vmatprep.subr.mxu0 0.0
        %1338 = vmatpush2.msra.mxu0 0.0
        %1339 = vmatprep.subr.mxu0 0.0
        %1340 = vmatpush2.msra.mxu0 0.0
        %1341 = vmatprep.subr.mxu0 0.0
        %1342 = vmatpush2.msra.mxu0 0.0
        %1343 = vmatprep.subr.mxu0 0.0
        %1344 = vmatpush2.msra.mxu0 0.0
        %1345 = vmatprep.subr.mxu0 0.0
        %1346 = vmatpush2.msra.mxu0 0.0
        %1347 = vmatprep.subr.mxu0 0.0
        %1348 = vmatpush2.msra.mxu0 0.0
        %1349 = vmatprep.subr.mxu0 0.0
        %1350 = vmatpush2.msra.mxu0 0.0
        %1351 = vmatprep.subr.mxu0 0.0
        %1352 = vmatpush2.msra.mxu0 0.0
        %1353 = vmatprep.subr.mxu0 0.0
        %1354 = vmatpush2.msra.mxu0 0.0
        %1355 = vmatprep.mubr.f32.mxu0 0.0
        %1356 = vmatmul.mubr.f32.gmra.mxu0 %v1289
        %v1357 = vpop.f32.mrf.mxu0
        %v1358 = vadd.f32 0.0, %v1357
        %v1359 = vpop.f32.mrf.mxu0
        %1360 = vdwg.mxu0
        %1361 = vrot.lane.b32.xlu0 %v983, 112
        %v1362 = vpop.permute.xlu0 %1361
        %1363 = vrot.lane.b32.xlu0 %v983, 80
        %v1364 = vpop.permute.xlu0 %1363
        %v1365 = vsel %vm1020, %v1362, 0
        %v1367 = vsel %vm1020, %v1364, 0
        %1369 = vmatprep.subr.mxu0 0.0
        %1370 = vmatpush1.xpose.msra.mxu0 0.0
        %1371 = vmatprep.subr.mxu0 0.0
        %1372 = vmatpush1.xpose.msra.mxu0 0.0
        %1373 = vmatprep.subr.mxu0 0.0
        %1374 = vmatpush1.xpose.msra.mxu0 0.0
        %1375 = vmatprep.subr.mxu0 0.0
        %1376 = vmatpush1.xpose.msra.mxu0 0.0
        %1377 = vmatprep.subr.mxu0 0.0
        %1378 = vmatpush1.xpose.msra.mxu0 0.0
        %1379 = vmatprep.subr.mxu0 0.0
        %1380 = vmatpush1.xpose.msra.mxu0 0.0
        %1381 = vmatprep.subr.mxu0 0.0
        %1382 = vmatpush1.xpose.msra.mxu0 0.0
        %1383 = vmatprep.subr.mxu0 0.0
        %1384 = vmatpush1.xpose.msra.mxu0 0.0
        %1385 = vmatprep.subr.mxu0 0.0
        %1386 = vmatpush1.xpose.msra.mxu0 0.0
        %1387 = vmatprep.subr.mxu0 0.0
        %1388 = vmatpush1.xpose.msra.mxu0 0.0
        %1389 = vmatprep.subr.mxu0 0.0
        %1390 = vmatpush1.xpose.msra.mxu0 0.0
        %1391 = vmatprep.subr.mxu0 0.0
        %1392 = vmatpush1.xpose.msra.mxu0 0.0
        %1393 = vmatprep.subr.mxu0 0.0
        %1394 = vmatpush1.xpose.msra.mxu0 0.0
        %1395 = vmatprep.subr.mxu0 0.0
        %1396 = vmatpush1.xpose.msra.mxu0 0.0
        %1397 = vmatprep.subr.mxu0 0.0
        %1398 = vmatpush1.xpose.msra.mxu0 0.0
        %1399 = vmatprep.subr.mxu0 0.0
        %1400 = vmatpush1.xpose.msra.mxu0 %v1367
        %1401 = vmatprep.subr.mxu0 0.0
        %1402 = vmatpush2.xpose.msra.mxu0 0.0
        %1403 = vmatprep.subr.mxu0 0.0
        %1404 = vmatpush2.xpose.msra.mxu0 0.0
        %1405 = vmatprep.subr.mxu0 0.0
        %1406 = vmatpush2.xpose.msra.mxu0 0.0
        %1407 = vmatprep.subr.mxu0 0.0
        %1408 = vmatpush2.xpose.msra.mxu0 0.0
        %1409 = vmatprep.subr.mxu0 0.0
        %1410 = vmatpush2.xpose.msra.mxu0 0.0
        %1411 = vmatprep.subr.mxu0 0.0
        %1412 = vmatpush2.xpose.msra.mxu0 0.0
        %1413 = vmatprep.subr.mxu0 0.0
        %1414 = vmatpush2.xpose.msra.mxu0 0.0
        %1415 = vmatprep.subr.mxu0 0.0
        %1416 = vmatpush2.xpose.msra.mxu0 0.0
        %1417 = vmatprep.subr.mxu0 0.0
        %1418 = vmatpush2.xpose.msra.mxu0 0.0
        %1419 = vmatprep.subr.mxu0 0.0
        %1420 = vmatpush2.xpose.msra.mxu0 0.0
        %1421 = vmatprep.subr.mxu0 0.0
        %1422 = vmatpush2.xpose.msra.mxu0 0.0
        %1423 = vmatprep.subr.mxu0 0.0
        %1424 = vmatpush2.xpose.msra.mxu0 0.0
        %1425 = vmatprep.subr.mxu0 0.0
        %1426 = vmatpush2.xpose.msra.mxu0 0.0
        %1427 = vmatprep.subr.mxu0 0.0
        %1428 = vmatpush2.xpose.msra.mxu0 0.0
        %1429 = vmatprep.subr.mxu0 0.0
        %1430 = vmatpush2.xpose.msra.mxu0 0.0
        %1431 = vmatprep.subr.mxu0 0.0
        %1432 = vmatpush2.xpose.msra.mxu0 0.0
        %1433 = vmatprep.mubr.f32.mxu0 0.0
        %1434 = vmatmul.mubr.f32.gmra.mxu0 %v1365
        %v1435 = vpop.f32.mrf.mxu0
        %v1436 = vadd.f32 0.0, %v1435
        %v1437 = vpop.f32.mrf.mxu0
        %1438 = vdwg.mxu0
        %1439 = vrot.lane.b32.xlu0 %v988, 112
        %v1440 = vpop.permute.xlu0 %1439
        %1441 = vrot.lane.b32.xlu0 %v988, 80
        %v1442 = vpop.permute.xlu0 %1441
        %v1443 = vsel %vm1020, %v1440, 0
        %v1445 = vsel %vm1020, %v1442, 0
        %1447 = vmatprep.subr.mxu0 0.0
        %1448 = vmatpush1.xpose.msra.mxu0 0.0
        %1449 = vmatprep.subr.mxu0 0.0
        %1450 = vmatpush1.xpose.msra.mxu0 0.0
        %1451 = vmatprep.subr.mxu0 0.0
        %1452 = vmatpush1.xpose.msra.mxu0 0.0
        %1453 = vmatprep.subr.mxu0 0.0
        %1454 = vmatpush1.xpose.msra.mxu0 0.0
        %1455 = vmatprep.subr.mxu0 0.0
        %1456 = vmatpush1.xpose.msra.mxu0 0.0
        %1457 = vmatprep.subr.mxu0 0.0
        %1458 = vmatpush1.xpose.msra.mxu0 0.0
        %1459 = vmatprep.subr.mxu0 0.0
        %1460 = vmatpush1.xpose.msra.mxu0 0.0
        %1461 = vmatprep.subr.mxu0 0.0
        %1462 = vmatpush1.xpose.msra.mxu0 0.0
        %1463 = vmatprep.subr.mxu0 0.0
        %1464 = vmatpush1.xpose.msra.mxu0 0.0
        %1465 = vmatprep.subr.mxu0 0.0
        %1466 = vmatpush1.xpose.msra.mxu0 0.0
        %1467 = vmatprep.subr.mxu0 0.0
        %1468 = vmatpush1.xpose.msra.mxu0 0.0
        %1469 = vmatprep.subr.mxu0 0.0
        %1470 = vmatpush1.xpose.msra.mxu0 0.0
        %1471 = vmatprep.subr.mxu0 0.0
        %1472 = vmatpush1.xpose.msra.mxu0 0.0
        %1473 = vmatprep.subr.mxu0 0.0
        %1474 = vmatpush1.xpose.msra.mxu0 0.0
        %1475 = vmatprep.subr.mxu0 0.0
        %1476 = vmatpush1.xpose.msra.mxu0 0.0
        %1477 = vmatprep.subr.mxu0 0.0
        %1478 = vmatpush1.xpose.msra.mxu0 %v1445
        %1479 = vmatprep.subr.mxu0 0.0
        %1480 = vmatpush2.xpose.msra.mxu0 0.0
        %1481 = vmatprep.subr.mxu0 0.0
        %1482 = vmatpush2.xpose.msra.mxu0 0.0
        %1483 = vmatprep.subr.mxu0 0.0
        %1484 = vmatpush2.xpose.msra.mxu0 0.0
        %1485 = vmatprep.subr.mxu0 0.0
        %1486 = vmatpush2.xpose.msra.mxu0 0.0
        %1487 = vmatprep.subr.mxu0 0.0
        %1488 = vmatpush2.xpose.msra.mxu0 0.0
        %1489 = vmatprep.subr.mxu0 0.0
        %1490 = vmatpush2.xpose.msra.mxu0 0.0
        %1491 = vmatprep.subr.mxu0 0.0
        %1492 = vmatpush2.xpose.msra.mxu0 0.0
        %1493 = vmatprep.subr.mxu0 0.0
        %1494 = vmatpush2.xpose.msra.mxu0 0.0
        %1495 = vmatprep.subr.mxu0 0.0
        %1496 = vmatpush2.xpose.msra.mxu0 0.0
        %1497 = vmatprep.subr.mxu0 0.0
        %1498 = vmatpush2.xpose.msra.mxu0 0.0
        %1499 = vmatprep.subr.mxu0 0.0
        %1500 = vmatpush2.xpose.msra.mxu0 0.0
        %1501 = vmatprep.subr.mxu0 0.0
        %1502 = vmatpush2.xpose.msra.mxu0 0.0
        %1503 = vmatprep.subr.mxu0 0.0
        %1504 = vmatpush2.xpose.msra.mxu0 0.0
        %1505 = vmatprep.subr.mxu0 0.0
        %1506 = vmatpush2.xpose.msra.mxu0 0.0
        %1507 = vmatprep.subr.mxu0 0.0
        %1508 = vmatpush2.xpose.msra.mxu0 0.0
        %1509 = vmatprep.subr.mxu0 0.0
        %1510 = vmatpush2.xpose.msra.mxu0 0.0
        %1511 = vmatprep.mubr.f32.mxu0 0.0
        %1512 = vmatmul.mubr.f32.gmra.mxu0 %v1443
        %v1513 = vpop.f32.mrf.mxu0
        %v1514 = vadd.f32 0.0, %v1513
        %v1515 = vpop.f32.mrf.mxu0
        %1516 = vdwg.mxu0
        %v1517 = vmul.f32 %v1436, 0.25
        %v1518 = vmul.f32 %v1514, 0.25
        %v1519 = vadd.f32 %v1517, %v1177
        %v1520 = vadd.f32 %v1518, %v1181
        %v1521 = vsel %vm1186, %v1519, -inf
        %1522 = vmax.xlane.f32.xlu0 %v1521
        %v1523 = vpop.xlane.xlu0 %1522
        %v1524 = vsel %vm1186, %v1520, -inf
        %1525 = vmax.xlane.f32.xlu0 %v1524
        %v1526 = vpop.xlane.xlu0 %1525
        %v1527 = vsub.f32 %v1519, %v1523
        %v1528 = vsub.f32 %v1520, %v1526
        %v1529 = vmul.f32 %v1527, 1.442695
        %v1530 = vpow.pop %v1529
        %v1531 = vmul.f32 %v1528, 1.442695
        %v1532 = vpow.pop %v1531
        %v1533 = vsel %vm1186, %v1530, 0.0
        %1534 = vadd.xlane.f32.xlu0 %v1533
        %v1535 = vpop.xlane.xlu0 %1534
        %v1536 = vsel %vm1186, %v1532, 0.0
        %1537 = vadd.xlane.f32.xlu0 %v1536
        %v1538 = vpop.xlane.xlu0 %1537
        %v1539 = vrcp.pop %v1535
        %v1540 = vrcp.pop %v1538
        %v1541 = vmul.f32 %v1530, %v1539
        %v1542 = vmul.f32 %v1532, %v1540
        %1543 = vrot.lane.b32.xlu0 %v983, 48
        %v1544 = vpop.permute.xlu0 %1543
        %v1547 = vsel %vm1186, %v1541, 0
        %1549 = vmatprep.subr.mxu0 0.0
        %1550 = vmatpush1.msra.mxu0 0.0
        %1551 = vmatprep.subr.mxu0 0.0
        %1552 = vmatpush1.msra.mxu0 0.0
        %1553 = vmatprep.subr.mxu0 0.0
        %1554 = vmatpush1.msra.mxu0 0.0
        %1555 = vmatprep.subr.mxu0 0.0
        %1556 = vmatpush1.msra.mxu0 0.0
        %1557 = vmatprep.subr.mxu0 0.0
        %1558 = vmatpush1.msra.mxu0 0.0
        %1559 = vmatprep.subr.mxu0 0.0
        %1560 = vmatpush1.msra.mxu0 0.0
        %1561 = vmatprep.subr.mxu0 0.0
        %1562 = vmatpush1.msra.mxu0 0.0
        %1563 = vmatprep.subr.mxu0 0.0
        %1564 = vmatpush1.msra.mxu0 0.0
        %1565 = vmatprep.subr.mxu0 0.0
        %1566 = vmatpush1.msra.mxu0 0.0
        %1567 = vmatprep.subr.mxu0 0.0
        %1568 = vmatpush1.msra.mxu0 0.0
        %1569 = vmatprep.subr.mxu0 0.0
        %1570 = vmatpush1.msra.mxu0 0.0
        %1571 = vmatprep.subr.mxu0 0.0
        %1572 = vmatpush1.msra.mxu0 0.0
        %1573 = vmatprep.subr.mxu0 0.0
        %1574 = vmatpush1.msra.mxu0 0.0
        %1575 = vmatprep.subr.mxu0 0.0
        %1576 = vmatpush1.msra.mxu0 0.0
        %1577 = vmatprep.subr.mxu0 0.0
        %1578 = vmatpush1.msra.mxu0 0.0
        %1579 = vmatprep.subr.mxu0 0.0
        %1580 = vmatpush1.msra.mxu0 %v1544
        %1581 = vmatprep.subr.mxu0 0.0
        %1582 = vmatpush2.msra.mxu0 0.0
        %1583 = vmatprep.subr.mxu0 0.0
        %1584 = vmatpush2.msra.mxu0 0.0
        %1585 = vmatprep.subr.mxu0 0.0
        %1586 = vmatpush2.msra.mxu0 0.0
        %1587 = vmatprep.subr.mxu0 0.0
        %1588 = vmatpush2.msra.mxu0 0.0
        %1589 = vmatprep.subr.mxu0 0.0
        %1590 = vmatpush2.msra.mxu0 0.0
        %1591 = vmatprep.subr.mxu0 0.0
        %1592 = vmatpush2.msra.mxu0 0.0
        %1593 = vmatprep.subr.mxu0 0.0
        %1594 = vmatpush2.msra.mxu0 0.0
        %1595 = vmatprep.subr.mxu0 0.0
        %1596 = vmatpush2.msra.mxu0 0.0
        %1597 = vmatprep.subr.mxu0 0.0
        %1598 = vmatpush2.msra.mxu0 0.0
        %1599 = vmatprep.subr.mxu0 0.0
        %1600 = vmatpush2.msra.mxu0 0.0
        %1601 = vmatprep.subr.mxu0 0.0
        %1602 = vmatpush2.msra.mxu0 0.0
        %1603 = vmatprep.subr.mxu0 0.0
        %1604 = vmatpush2.msra.mxu0 0.0
        %1605 = vmatprep.subr.mxu0 0.0
        %1606 = vmatpush2.msra.mxu0 0.0
        %1607 = vmatprep.subr.mxu0 0.0
        %1608 = vmatpush2.msra.mxu0 0.0
        %1609 = vmatprep.subr.mxu0 0.0
        %1610 = vmatpush2.msra.mxu0 0.0
        %1611 = vmatprep.subr.mxu0 0.0
        %1612 = vmatpush2.msra.mxu0 0.0
        %1613 = vmatprep.mubr.f32.mxu0 0.0
        %1614 = vmatmul.mubr.f32.gmra.mxu0 %v1547
        %v1615 = vpop.f32.mrf.mxu0
        %v1616 = vadd.f32 0.0, %v1615
        %v1617 = vpop.f32.mrf.mxu0
        %1618 = vdwg.mxu0
        %1619 = vrot.lane.b32.xlu0 %v988, 48
        %v1620 = vpop.permute.xlu0 %1619
        %v1623 = vsel %vm1186, %v1542, 0
        %1625 = vmatprep.subr.mxu0 0.0
        %1626 = vmatpush1.msra.mxu0 0.0
        %1627 = vmatprep.subr.mxu0 0.0
        %1628 = vmatpush1.msra.mxu0 0.0
        %1629 = vmatprep.subr.mxu0 0.0
        %1630 = vmatpush1.msra.mxu0 0.0
        %1631 = vmatprep.subr.mxu0 0.0
        %1632 = vmatpush1.msra.mxu0 0.0
        %1633 = vmatprep.subr.mxu0 0.0
        %1634 = vmatpush1.msra.mxu0 0.0
        %1635 = vmatprep.subr.mxu0 0.0
        %1636 = vmatpush1.msra.mxu0 0.0
        %1637 = vmatprep.subr.mxu0 0.0
        %1638 = vmatpush1.msra.mxu0 0.0
        %1639 = vmatprep.subr.mxu0 0.0
        %1640 = vmatpush1.msra.mxu0 0.0
        %1641 = vmatprep.subr.mxu0 0.0
        %1642 = vmatpush1.msra.mxu0 0.0
        %1643 = vmatprep.subr.mxu0 0.0
        %1644 = vmatpush1.msra.mxu0 0.0
        %1645 = vmatprep.subr.mxu0 0.0
        %1646 = vmatpush1.msra.mxu0 0.0
        %1647 = vmatprep.subr.mxu0 0.0
        %1648 = vmatpush1.msra.mxu0 0.0
        %1649 = vmatprep.subr.mxu0 0.0
        %1650 = vmatpush1.msra.mxu0 0.0
        %1651 = vmatprep.subr.mxu0 0.0
        %1652 = vmatpush1.msra.mxu0 0.0
        %1653 = vmatprep.subr.mxu0 0.0
        %1654 = vmatpush1.msra.mxu0 0.0
        %1655 = vmatprep.subr.mxu0 0.0
        %1656 = vmatpush1.msra.mxu0 %v1620
        %1657 = vmatprep.subr.mxu0 0.0
        %1658 = vmatpush2.msra.mxu0 0.0
        %1659 = vmatprep.subr.mxu0 0.0
        %1660 = vmatpush2.msra.mxu0 0.0
        %1661 = vmatprep.subr.mxu0 0.0
        %1662 = vmatpush2.msra.mxu0 0.0
        %1663 = vmatprep.subr.mxu0 0.0
        %1664 = vmatpush2.msra.mxu0 0.0
        %1665 = vmatprep.subr.mxu0 0.0
        %1666 = vmatpush2.msra.mxu0 0.0
        %1667 = vmatprep.subr.mxu0 0.0
        %1668 = vmatpush2.msra.mxu0 0.0
        %1669 = vmatprep.subr.mxu0 0.0
        %1670 = vmatpush2.msra.mxu0 0.0
        %1671 = vmatprep.subr.mxu0 0.0
        %1672 = vmatpush2.msra.mxu0 0.0
        %1673 = vmatprep.subr.mxu0 0.0
        %1674 = vmatpush2.msra.mxu0 0.0
        %1675 = vmatprep.subr.mxu0 0.0
        %1676 = vmatpush2.msra.mxu0 0.0
        %1677 = vmatprep.subr.mxu0 0.0
        %1678 = vmatpush2.msra.mxu0 0.0
        %1679 = vmatprep.subr.mxu0 0.0
        %1680 = vmatpush2.msra.mxu0 0.0
        %1681 = vmatprep.subr.mxu0 0.0
        %1682 = vmatpush2.msra.mxu0 0.0
        %1683 = vmatprep.subr.mxu0 0.0
        %1684 = vmatpush2.msra.mxu0 0.0
        %1685 = vmatprep.subr.mxu0 0.0
        %1686 = vmatpush2.msra.mxu0 0.0
        %1687 = vmatprep.subr.mxu0 0.0
        %1688 = vmatpush2.msra.mxu0 0.0
        %1689 = vmatprep.mubr.f32.mxu0 0.0
        %1690 = vmatmul.mubr.f32.gmra.mxu0 %v1623
        %v1691 = vpop.f32.mrf.mxu0
        %v1692 = vadd.f32 0.0, %v1691
        %v1693 = vpop.f32.mrf.mxu0
        %1694 = vdwg.mxu0
        %1697 = vrot.lane.b32.xlu0 %v1616, 16
        %v1698 = vpop.permute.xlu0 %1697
        %1699 = vrot.lane.b32.xlu0 %v1692, 16
        %v1700 = vpop.permute.xlu0 %1699
        %v1703 = vsel %vm1020, %v1282, %v1698
        %v1704 = vsel %vm1020, %v1358, %v1700
        %v1705 = vld [vmem:[%s704] sm:$0xff]
        %v1706 = vld [vmem:[%s704 + $0x8] sm:$0xff]
        %v1707 = vld [vmem:[%s704 + $0x10] sm:$0xff]
        %v1708 = vld [vmem:[%s704 + $0x18] sm:$0xff]
        %v1709 = vld [vmem:[%s818] sm:$0x1]
        %v1711 = vlaneseq
        %v1712 = vshrl.u32 %v1711, 7
        %v1713 = vsub.s32 0, %v1712
        %v1714 = vrot.slane %v1709, %v1713
        %v1717 = vsel %vm909, %v1703, 0
        %v1720 = vsel %vm909, %v1704, 0
        %1722 = vmatprep.subr.mxu0 0.0
        %1723 = vmatpush1.msra.mxu0 0.0
        %1724 = vmatprep.subr.mxu0 0.0
        %1725 = vmatpush1.msra.mxu0 0.0
        %1726 = vmatprep.subr.mxu0 0.0
        %1727 = vmatpush1.msra.mxu0 0.0
        %1728 = vmatprep.subr.mxu0 0.0
        %1729 = vmatpush1.msra.mxu0 0.0
        %1730 = vmatprep.subr.mxu0 0.0
        %1731 = vmatpush1.msra.mxu0 0.0
        %1732 = vmatprep.subr.mxu0 0.0
        %1733 = vmatpush1.msra.mxu0 0.0
        %1734 = vmatprep.subr.mxu0 0.0
        %1735 = vmatpush1.msra.mxu0 0.0
        %1736 = vmatprep.subr.mxu0 0.0
        %1737 = vmatpush1.msra.mxu0 0.0
        %1738 = vmatprep.subr.mxu0 0.0
        %1739 = vmatpush1.msra.mxu0 0.0
        %1740 = vmatprep.subr.mxu0 0.0
        %1741 = vmatpush1.msra.mxu0 0.0
        %1742 = vmatprep.subr.mxu0 0.0
        %1743 = vmatpush1.msra.mxu0 0.0
        %1744 = vmatprep.subr.mxu0 0.0
        %1745 = vmatpush1.msra.mxu0 0.0
        %1746 = vmatprep.subr.mxu0 0.0
        %1747 = vmatpush1.msra.mxu0 %v1708
        %1748 = vmatprep.subr.mxu0 0.0
        %1749 = vmatpush1.msra.mxu0 %v1707
        %1750 = vmatprep.subr.mxu0 0.0
        %1751 = vmatpush1.msra.mxu0 %v1706
        %1752 = vmatprep.subr.mxu0 0.0
        %1753 = vmatpush1.msra.mxu0 %v1705
        %1754 = vmatprep.subr.mxu0 0.0
        %1755 = vmatpush2.msra.mxu0 0.0
        %1756 = vmatprep.subr.mxu0 0.0
        %1757 = vmatpush2.msra.mxu0 0.0
        %1758 = vmatprep.subr.mxu0 0.0
        %1759 = vmatpush2.msra.mxu0 0.0
        %1760 = vmatprep.subr.mxu0 0.0
        %1761 = vmatpush2.msra.mxu0 0.0
        %1762 = vmatprep.subr.mxu0 0.0
        %1763 = vmatpush2.msra.mxu0 0.0
        %1764 = vmatprep.subr.mxu0 0.0
        %1765 = vmatpush2.msra.mxu0 0.0
        %1766 = vmatprep.subr.mxu0 0.0
        %1767 = vmatpush2.msra.mxu0 0.0
        %1768 = vmatprep.subr.mxu0 0.0
        %1769 = vmatpush2.msra.mxu0 0.0
        %1770 = vmatprep.subr.mxu0 0.0
        %1771 = vmatpush2.msra.mxu0 0.0
        %1772 = vmatprep.subr.mxu0 0.0
        %1773 = vmatpush2.msra.mxu0 0.0
        %1774 = vmatprep.subr.mxu0 0.0
        %1775 = vmatpush2.msra.mxu0 0.0
        %1776 = vmatprep.subr.mxu0 0.0
        %1777 = vmatpush2.msra.mxu0 0.0
        %1778 = vmatprep.subr.mxu0 0.0
        %1779 = vmatpush2.msra.mxu0 0.0
        %1780 = vmatprep.subr.mxu0 0.0
        %1781 = vmatpush2.msra.mxu0 0.0
        %1782 = vmatprep.subr.mxu0 0.0
        %1783 = vmatpush2.msra.mxu0 0.0
        %1784 = vmatprep.subr.mxu0 0.0
        %1785 = vmatpush2.msra.mxu0 0.0
        %1786 = vmatprep.mubr.f32.mxu0 0.0
        %1787 = vmatmul.mubr.f32.gmra.mxu0 %v1717
        %v1788 = vpop.f32.mrf.mxu0
        %v1789 = vadd.f32 %v1714, %v1788
        %v1790 = vpop.f32.mrf.mxu0
        %1791 = vmatprep.mubr.f32.mxu0 0.0
        %1792 = vmatmul.mubr.f32.gmra.mxu0 %v1720
        %v1793 = vpop.f32.mrf.mxu0
        %v1794 = vadd.f32 %v1714, %v1793
        %v1795 = vpop.f32.mrf.mxu0
        %1796 = vdwg.mxu0
        %v1797 = vadd.f32 %v1789, %v896
        %v1798 = vadd.f32 %v1794, %v897
        %v1799 = vld [vmem:[%s821] sm:$0x1]
        %v1800 = vld [vmem:[%s824] sm:$0x1]
        %v1801 = vsel %vm909, %v1797, 0.0
        %1802 = vadd.xlane.f32.xlu0 %v1801
        %v1803 = vpop.xlane.xlu0 %1802
        %v1804 = vsel %vm909, %v1798, 0.0
        %1805 = vadd.xlane.f32.xlu0 %v1804
        %v1806 = vpop.xlane.xlu0 %1805
        %v1807 = vrcp.pop 32.0
        %v1808 = vmul.f32 %v1803, %v1807
        %v1809 = vmul.f32 %v1806, %v1807
        %v1810 = vsub.f32 %v1797, %v1808
        %v1811 = vsub.f32 %v1798, %v1809
        %v1812 = vmul.f32 %v1810, %v1810
        %v1813 = vmul.f32 %v1811, %v1811
        %v1814 = vsel %vm909, %v1812, 0.0
        %1815 = vadd.xlane.f32.xlu0 %v1814
        %v1816 = vpop.xlane.xlu0 %1815
        %v1817 = vsel %vm909, %v1813, 0.0
        %1818 = vadd.xlane.f32.xlu0 %v1817
        %v1819 = vpop.xlane.xlu0 %1818
        %v1820 = vmul.f32 %v1816, %v1807
        %v1821 = vmul.f32 %v1819, %v1807
        %v1822 = vadd.f32 %v1820, 1e-12
        %v1823 = vadd.f32 %v1821, 1e-12
        %v1824 = vrsqrt.pop %v1822
        %v1825 = vrsqrt.pop %v1823
        %v1826 = vmul.f32 %v1810, %v1824
        %v1827 = vmul.f32 %v1811, %v1825
        %v1829 = vlaneseq
        %v1830 = vshrl.u32 %v1829, 7
        %v1831 = vsub.s32 0, %v1830
        %v1832 = vrot.slane %v1799, %v1831
        %v1834 = vmul.f32 %v1826, %v1832
        %v1835 = vmul.f32 %v1827, %v1832
        %v1837 = vlaneseq
        %v1838 = vshrl.u32 %v1837, 7
        %v1839 = vsub.s32 0, %v1838
        %v1840 = vrot.slane %v1800, %v1839
        %v1842 = vadd.f32 %v1834, %v1840
        %v1843 = vadd.f32 %v1835, %v1840
        %v1844 = vld [vmem:[%s713] sm:$0xff]
        %v1845 = vld [vmem:[%s713 + $0x8] sm:$0xff]
        %v1846 = vld [vmem:[%s713 + $0x10] sm:$0xff]
        %v1847 = vld [vmem:[%s713 + $0x18] sm:$0xff]
        %v1848 = vld [vmem:[%s827] sm:$0x1]
        %v1850 = vlaneseq
        %v1851 = vshrl.u32 %v1850, 7
        %v1852 = vsub.s32 0, %v1851
        %v1853 = vrot.slane %v1848, %v1852
        %v1856 = vsel %vm909, %v1842, 0
        %v1859 = vsel %vm909, %v1843, 0
        %1861 = vmatprep.subr.mxu0 0.0
        %1862 = vmatpush1.msra.mxu0 0.0
        %1863 = vmatprep.subr.mxu0 0.0
        %1864 = vmatpush1.msra.mxu0 0.0
        %1865 = vmatprep.subr.mxu0 0.0
        %1866 = vmatpush1.msra.mxu0 0.0
        %1867 = vmatprep.subr.mxu0 0.0
        %1868 = vmatpush1.msra.mxu0 0.0
        %1869 = vmatprep.subr.mxu0 0.0
        %1870 = vmatpush1.msra.mxu0 0.0
        %1871 = vmatprep.subr.mxu0 0.0
        %1872 = vmatpush1.msra.mxu0 0.0
        %1873 = vmatprep.subr.mxu0 0.0
        %1874 = vmatpush1.msra.mxu0 0.0
        %1875 = vmatprep.subr.mxu0 0.0
        %1876 = vmatpush1.msra.mxu0 0.0
        %1877 = vmatprep.subr.mxu0 0.0
        %1878 = vmatpush1.msra.mxu0 0.0
        %1879 = vmatprep.subr.mxu0 0.0
        %1880 = vmatpush1.msra.mxu0 0.0
        %1881 = vmatprep.subr.mxu0 0.0
        %1882 = vmatpush1.msra.mxu0 0.0
        %1883 = vmatprep.subr.mxu0 0.0
        %1884 = vmatpush1.msra.mxu0 0.0
        %1885 = vmatprep.subr.mxu0 0.0
        %1886 = vmatpush1.msra.mxu0 %v1847
        %1887 = vmatprep.subr.mxu0 0.0
        %1888 = vmatpush1.msra.mxu0 %v1846
        %1889 = vmatprep.subr.mxu0 0.0
        %1890 = vmatpush1.msra.mxu0 %v1845
        %1891 = vmatprep.subr.mxu0 0.0
        %1892 = vmatpush1.msra.mxu0 %v1844
        %1893 = vmatprep.subr.mxu0 0.0
        %1894 = vmatpush2.msra.mxu0 0.0
        %1895 = vmatprep.subr.mxu0 0.0
        %1896 = vmatpush2.msra.mxu0 0.0
        %1897 = vmatprep.subr.mxu0 0.0
        %1898 = vmatpush2.msra.mxu0 0.0
        %1899 = vmatprep.subr.mxu0 0.0
        %1900 = vmatpush2.msra.mxu0 0.0
        %1901 = vmatprep.subr.mxu0 0.0
        %1902 = vmatpush2.msra.mxu0 0.0
        %1903 = vmatprep.subr.mxu0 0.0
        %1904 = vmatpush2.msra.mxu0 0.0
        %1905 = vmatprep.subr.mxu0 0.0
        %1906 = vmatpush2.msra.mxu0 0.0
        %1907 = vmatprep.subr.mxu0 0.0
        %1908 = vmatpush2.msra.mxu0 0.0
        %1909 = vmatprep.subr.mxu0 0.0
        %1910 = vmatpush2.msra.mxu0 0.0
        %1911 = vmatprep.subr.mxu0 0.0
        %1912 = vmatpush2.msra.mxu0 0.0
        %1913 = vmatprep.subr.mxu0 0.0
        %1914 = vmatpush2.msra.mxu0 0.0
        %1915 = vmatprep.subr.mxu0 0.0
        %1916 = vmatpush2.msra.mxu0 0.0
        %1917 = vmatprep.subr.mxu0 0.0
        %1918 = vmatpush2.msra.mxu0 0.0
        %1919 = vmatprep.subr.mxu0 0.0
        %1920 = vmatpush2.msra.mxu0 0.0
        %1921 = vmatprep.subr.mxu0 0.0
        %1922 = vmatpush2.msra.mxu0 0.0
        %1923 = vmatprep.subr.mxu0 0.0
        %1924 = vmatpush2.msra.mxu0 0.0
        %1925 = vmatprep.mubr.f32.mxu0 0.0
        %1926 = vmatmul.mubr.f32.gmra.mxu0 %v1856
        %v1927 = vpop.f32.mrf.mxu0
        %v1928 = vadd.f32 %v1853, %v1927
        %v1929 = vpop.f32.mrf.mxu0
        %1930 = vmatprep.mubr.f32.mxu0 0.0
        %1931 = vmatmul.mubr.f32.gmra.mxu0 %v1859
        %v1932 = vpop.f32.mrf.mxu0
        %v1933 = vadd.f32 %v1853, %v1932
        %v1934 = vpop.f32.mrf.mxu0
        %1935 = vdwg.mxu0
        %v1936 = vmul.f32 %v1928, %v1928
        %v1937 = vmul.f32 %v1933, %v1933
        %v1938 = vmul.f32 %v1928, %v1936
        %v1939 = vmul.f32 %v1933, %v1937
        %v1940 = vmul.f32 %v1938, 0.044715
        %v1941 = vmul.f32 %v1939, 0.044715
        %v1942 = vadd.f32 %v1928, %v1940
        %v1943 = vadd.f32 %v1933, %v1941
        %v1944 = vmul.f32 %v1942, 0.7978846
        %v1945 = vmul.f32 %v1943, 0.7978846
        %v1946 = vtanh.pop %v1944
        %v1947 = vtanh.pop %v1945
        %v1948 = vadd.f32 %v1946, 1.0
        %v1949 = vadd.f32 %v1947, 1.0
        %v1950 = vmul.f32 %v1948, 0.5
        %v1951 = vmul.f32 %v1949, 0.5
        %v1952 = vmul.f32 %v1928, %v1950
        %v1953 = vmul.f32 %v1933, %v1951
        %v1954 = vld [vmem:[%s832] sm:$0xff]
        %v1955 = vld [vmem:[%s832 + $0x8] sm:$0xff]
        %v1956 = vld [vmem:[%s832 + $0x10] sm:$0xff]
        %v1957 = vld [vmem:[%s832 + $0x18] sm:$0xff]
        %v1958 = vld [vmem:[%s832 + $0x20] sm:$0xff]
        %v1959 = vld [vmem:[%s832 + $0x28] sm:$0xff]
        %v1960 = vld [vmem:[%s832 + $0x30] sm:$0xff]
        %v1961 = vld [vmem:[%s832 + $0x38] sm:$0xff]
        %v1962 = vld [vmem:[%s835] sm:$0x1]
        %v1964 = vlaneseq
        %v1965 = vshrl.u32 %v1964, 7
        %v1966 = vsub.s32 0, %v1965
        %v1967 = vrot.slane %v1962, %v1966
        %vm1969 = vcmask 523264
        %v1971 = vsel %vm1969, %v1952, 0
        %v1974 = vsel %vm1969, %v1953, 0
        %1976 = vmatprep.subr.mxu0 0.0
        %1977 = vmatpush1.msra.mxu0 0.0
        %1978 = vmatprep.subr.mxu0 0.0
        %1979 = vmatpush1.msra.mxu0 0.0
        %1980 = vmatprep.subr.mxu0 0.0
        %1981 = vmatpush1.msra.mxu0 0.0
        %1982 = vmatprep.subr.mxu0 0.0
        %1983 = vmatpush1.msra.mxu0 0.0
        %1984 = vmatprep.subr.mxu0 0.0
        %1985 = vmatpush1.msra.mxu0 0.0
        %1986 = vmatprep.subr.mxu0 0.0
        %1987 = vmatpush1.msra.mxu0 0.0
        %1988 = vmatprep.subr.mxu0 0.0
        %1989 = vmatpush1.msra.mxu0 0.0
        %1990 = vmatprep.subr.mxu0 0.0
        %1991 = vmatpush1.msra.mxu0 0.0
        %1992 = vmatprep.subr.mxu0 0.0
        %1993 = vmatpush1.msra.mxu0 %v1961
        %1994 = vmatprep.subr.mxu0 0.0
        %1995 = vmatpush1.msra.mxu0 %v1960
        %1996 = vmatprep.subr.mxu0 0.0
        %1997 = vmatpush1.msra.mxu0 %v1959
        %1998 = vmatprep.subr.mxu0 0.0
        %1999 = vmatpush1.msra.mxu0 %v1958
        %2000 = vmatprep.subr.mxu0 0.0
        %2001 = vmatpush1.msra.mxu0 %v1957
        %2002 = vmatprep.subr.mxu0 0.0
        %2003 = vmatpush1.msra.mxu0 %v1956
        %2004 = vmatprep.subr.mxu0 0.0
        %2005 = vmatpush1.msra.mxu0 %v1955
        %2006 = vmatprep.subr.mxu0 0.0
        %2007 = vmatpush1.msra.mxu0 %v1954
        %2008 = vmatprep.subr.mxu0 0.0
        %2009 = vmatpush2.msra.mxu0 0.0
        %2010 = vmatprep.subr.mxu0 0.0
        %2011 = vmatpush2.msra.mxu0 0.0
        %2012 = vmatprep.subr.mxu0 0.0
        %2013 = vmatpush2.msra.mxu0 0.0
        %2014 = vmatprep.subr.mxu0 0.0
        %2015 = vmatpush2.msra.mxu0 0.0
        %2016 = vmatprep.subr.mxu0 0.0
        %2017 = vmatpush2.msra.mxu0 0.0
        %2018 = vmatprep.subr.mxu0 0.0
        %2019 = vmatpush2.msra.mxu0 0.0
        %2020 = vmatprep.subr.mxu0 0.0
        %2021 = vmatpush2.msra.mxu0 0.0
        %2022 = vmatprep.subr.mxu0 0.0
        %2023 = vmatpush2.msra.mxu0 0.0
        %2024 = vmatprep.subr.mxu0 0.0
        %2025 = vmatpush2.msra.mxu0 0.0
        %2026 = vmatprep.subr.mxu0 0.0
        %2027 = vmatpush2.msra.mxu0 0.0
        %2028 = vmatprep.subr.mxu0 0.0
        %2029 = vmatpush2.msra.mxu0 0.0
        %2030 = vmatprep.subr.mxu0 0.0
        %2031 = vmatpush2.msra.mxu0 0.0
        %2032 = vmatprep.subr.mxu0 0.0
        %2033 = vmatpush2.msra.mxu0 0.0
        %2034 = vmatprep.subr.mxu0 0.0
        %2035 = vmatpush2.msra.mxu0 0.0
        %2036 = vmatprep.subr.mxu0 0.0
        %2037 = vmatpush2.msra.mxu0 0.0
        %2038 = vmatprep.subr.mxu0 0.0
        %2039 = vmatpush2.msra.mxu0 0.0
        %2040 = vmatprep.mubr.f32.mxu0 0.0
        %2041 = vmatmul.mubr.f32.gmra.mxu0 %v1971
        %v2042 = vpop.f32.mrf.mxu0
        %v2043 = vadd.f32 %v1967, %v2042
        %v2044 = vpop.f32.mrf.mxu0
        %2045 = vmatprep.mubr.f32.mxu0 0.0
        %2046 = vmatmul.mubr.f32.gmra.mxu0 %v1974
        %v2047 = vpop.f32.mrf.mxu0
        %v2048 = vadd.f32 %v1967, %v2047
        %v2049 = vpop.f32.mrf.mxu0
        %2050 = vdwg.mxu0
        %v2051 = vadd.f32 %v2043, %v1842
        %v2052 = vadd.f32 %v2048, %v1843
        %v2053 = vld [vmem:[%s838] sm:$0x1]
        %v2054 = vld [vmem:[%s841] sm:$0x1]
        %v2055 = vsel %vm909, %v2051, 0.0
        %2056 = vadd.xlane.f32.xlu0 %v2055
        %v2057 = vpop.xlane.xlu0 %2056
        %v2058 = vsel %vm909, %v2052, 0.0
        %2059 = vadd.xlane.f32.xlu0 %v2058
        %v2060 = vpop.xlane.xlu0 %2059
        %v2061 = vmul.f32 %v2057, %v1807
        %v2062 = vmul.f32 %v2060, %v1807
        %v2063 = vsub.f32 %v2051, %v2061
        %v2064 = vsub.f32 %v2052, %v2062
        %v2065 = vmul.f32 %v2063, %v2063
        %v2066 = vmul.f32 %v2064, %v2064
        %v2067 = vsel %vm909, %v2065, 0.0
        %2068 = vadd.xlane.f32.xlu0 %v2067
        %v2069 = vpop.xlane.xlu0 %2068
        %v2070 = vsel %vm909, %v2066, 0.0
        %2071 = vadd.xlane.f32.xlu0 %v2070
        %v2072 = vpop.xlane.xlu0 %2071
        %v2073 = vmul.f32 %v2069, %v1807
        %v2074 = vmul.f32 %v2072, %v1807
        %v2075 = vadd.f32 %v2073, 1e-12
        %v2076 = vadd.f32 %v2074, 1e-12
        %v2077 = vrsqrt.pop %v2075
        %v2078 = vrsqrt.pop %v2076
        %v2079 = vmul.f32 %v2063, %v2077
        %v2080 = vmul.f32 %v2064, %v2078
        %v2082 = vlaneseq
        %v2083 = vshrl.u32 %v2082, 7
        %v2084 = vsub.s32 0, %v2083
        %v2085 = vrot.slane %v2053, %v2084
        %v2087 = vmul.f32 %v2079, %v2085
        %v2088 = vmul.f32 %v2080, %v2085
        %v2090 = vlaneseq
        %v2091 = vshrl.u32 %v2090, 7
        %v2092 = vsub.s32 0, %v2091
        %v2093 = vrot.slane %v2054, %v2092
        %v2095 = vadd.f32 %v2087, %v2093
        %v2096 = vadd.f32 %v2088, %v2093
        %2097 = vst.msk [vmem:[#allocation2] sm:$0xff] %vm909, %v2095
        %2098 = vst.msk [vmem:[#allocation2 + $0x8] sm:$0xff] %vm909, %v2096
        %p2099 = scmp.eq.s32.totalorder %s38, 1
        // Predicated region
        $region117: #{bert_regressor_forward.1} parent=99 // pred_check
          %p2100 = pneg %p2099
        $region118: #{bert_regressor_forward.1} parent=99 // pred_check_branch
          %2102 = sbr.rel (%p2100) target = $region120
        $region119: #{bert_regressor_forward.1} parent=99 // pred_region
          %v2104 = vrot.slane %v2096, 7
          %vm2106 = vcmask 1040384
          %v2107 = vsel %vm2106, %v2095, %v2104
          %v2108 = vld [vmem:[%s16] sm:$0xff]
          %v2109 = vld [vmem:[%s16 + $0x8] sm:$0xff]
          %v2110 = vld [vmem:[%s16 + $0x10] sm:$0xff]
          %v2111 = vld [vmem:[%s16 + $0x18] sm:$0xff]
          %v2112 = vld [vmem:[%s17] sm:$0x1]
          %v2114 = vlaneseq
          %v2115 = vshrl.u32 %v2114, 7
          %v2116 = vsub.s32 0, %v2115
          %v2117 = vrot.slane %v2112, %v2116
          %v2120 = vsel %vm909, %v2107, 0
          %2122 = vmatprep.subr.mxu0 0.0
          %2123 = vmatpush1.msra.mxu0 0.0
          %2124 = vmatprep.subr.mxu0 0.0
          %2125 = vmatpush1.msra.mxu0 0.0
          %2126 = vmatprep.subr.mxu0 0.0
          %2127 = vmatpush1.msra.mxu0 0.0
          %2128 = vmatprep.subr.mxu0 0.0
          %2129 = vmatpush1.msra.mxu0 0.0
          %2130 = vmatprep.subr.mxu0 0.0
          %2131 = vmatpush1.msra.mxu0 0.0
          %2132 = vmatprep.subr.mxu0 0.0
          %2133 = vmatpush1.msra.mxu0 0.0
          %2134 = vmatprep.subr.mxu0 0.0
          %2135 = vmatpush1.msra.mxu0 0.0
          %2136 = vmatprep.subr.mxu0 0.0
          %2137 = vmatpush1.msra.mxu0 0.0
          %2138 = vmatprep.subr.mxu0 0.0
          %2139 = vmatpush1.msra.mxu0 0.0
          %2140 = vmatprep.subr.mxu0 0.0
          %2141 = vmatpush1.msra.mxu0 0.0
          %2142 = vmatprep.subr.mxu0 0.0
          %2143 = vmatpush1.msra.mxu0 0.0
          %2144 = vmatprep.subr.mxu0 0.0
          %2145 = vmatpush1.msra.mxu0 0.0
          %2146 = vmatprep.subr.mxu0 0.0
          %2147 = vmatpush1.msra.mxu0 %v2111
          %2148 = vmatprep.subr.mxu0 0.0
          %2149 = vmatpush1.msra.mxu0 %v2110
          %2150 = vmatprep.subr.mxu0 0.0
          %2151 = vmatpush1.msra.mxu0 %v2109
          %2152 = vmatprep.subr.mxu0 0.0
          %2153 = vmatpush1.msra.mxu0 %v2108
          %2154 = vmatprep.subr.mxu0 0.0
          %2155 = vmatpush2.msra.mxu0 0.0
          %2156 = vmatprep.subr.mxu0 0.0
          %2157 = vmatpush2.msra.mxu0 0.0
          %2158 = vmatprep.subr.mxu0 0.0
          %2159 = vmatpush2.msra.mxu0 0.0
          %2160 = vmatprep.subr.mxu0 0.0
          %2161 = vmatpush2.msra.mxu0 0.0
          %2162 = vmatprep.subr.mxu0 0.0
          %2163 = vmatpush2.msra.mxu0 0.0
          %2164 = vmatprep.subr.mxu0 0.0
          %2165 = vmatpush2.msra.mxu0 0.0
          %2166 = vmatprep.subr.mxu0 0.0
          %2167 = vmatpush2.msra.mxu0 0.0
          %2168 = vmatprep.subr.mxu0 0.0
          %2169 = vmatpush2.msra.mxu0 0.0
          %2170 = vmatprep.subr.mxu0 0.0
          %2171 = vmatpush2.msra.mxu0 0.0
          %2172 = vmatprep.subr.mxu0 0.0
          %2173 = vmatpush2.msra.mxu0 0.0
          %2174 = vmatprep.subr.mxu0 0.0
          %2175 = vmatpush2.msra.mxu0 0.0
          %2176 = vmatprep.subr.mxu0 0.0
          %2177 = vmatpush2.msra.mxu0 0.0
          %2178 = vmatprep.subr.mxu0 0.0
          %2179 = vmatpush2.msra.mxu0 0.0
          %2180 = vmatprep.subr.mxu0 0.0
          %2181 = vmatpush2.msra.mxu0 0.0
          %2182 = vmatprep.subr.mxu0 0.0
          %2183 = vmatpush2.msra.mxu0 0.0
          %2184 = vmatprep.subr.mxu0 0.0
          %2185 = vmatpush2.msra.mxu0 0.0
          %2186 = vmatprep.mubr.f32.mxu0 0.0
          %2187 = vmatmul.mubr.f32.gmra.mxu0 %v2120
          %v2188 = vpop.f32.mrf.mxu0
          %v2189 = vadd.f32 %v2117, %v2188
          %v2190 = vpop.f32.mrf.mxu0
          %2191 = vdwg.mxu0
          %v2192 = vtanh.pop %v2189
          %v2193 = vld [vmem:[#allocation8] sm:$0xff]
          %v2194 = vld [vmem:[#allocation8 + $0x8] sm:$0xff]
          %v2195 = vld [vmem:[#allocation8 + $0x10] sm:$0xff]
          %v2196 = vld [vmem:[#allocation8 + $0x18] sm:$0xff]
          %v2197 = vld [vmem:[%s19] sm:$0x1]
          %v2199 = vlaneseq
          %v2200 = vshrl.u32 %v2199, 7
          %v2201 = vsub.s32 0, %v2200
          %v2202 = vrot.slane %v2197, %v2201
          %v2205 = vsel %vm909, %v2192, 0
          %2207 = vmatprep.subr.mxu0 0.0
          %2208 = vmatpush1.msra.mxu0 0.0
          %2209 = vmatprep.subr.mxu0 0.0
          %2210 = vmatpush1.msra.mxu0 0.0
          %2211 = vmatprep.subr.mxu0 0.0
          %2212 = vmatpush1.msra.mxu0 0.0
          %2213 = vmatprep.subr.mxu0 0.0
          %2214 = vmatpush1.msra.mxu0 0.0
          %2215 = vmatprep.subr.mxu0 0.0
          %2216 = vmatpush1.msra.mxu0 0.0
          %2217 = vmatprep.subr.mxu0 0.0
          %2218 = vmatpush1.msra.mxu0 0.0
          %2219 = vmatprep.subr.mxu0 0.0
          %2220 = vmatpush1.msra.mxu0 0.0
          %2221 = vmatprep.subr.mxu0 0.0
          %2222 = vmatpush1.msra.mxu0 0.0
          %2223 = vmatprep.subr.mxu0 0.0
          %2224 = vmatpush1.msra.mxu0 0.0
          %2225 = vmatprep.subr.mxu0 0.0
          %2226 = vmatpush1.msra.mxu0 0.0
          %2227 = vmatprep.subr.mxu0 0.0
          %2228 = vmatpush1.msra.mxu0 0.0
          %2229 = vmatprep.subr.mxu0 0.0
          %2230 = vmatpush1.msra.mxu0 0.0
          %2231 = vmatprep.subr.mxu0 0.0
          %2232 = vmatpush1.msra.mxu0 %v2196
          %2233 = vmatprep.subr.mxu0 0.0
          %2234 = vmatpush1.msra.mxu0 %v2195
          %2235 = vmatprep.subr.mxu0 0.0
          %2236 = vmatpush1.msra.mxu0 %v2194
          %2237 = vmatprep.subr.mxu0 0.0
          %2238 = vmatpush1.msra.mxu0 %v2193
          %2239 = vmatprep.subr.mxu0 0.0
          %2240 = vmatpush2.msra.mxu0 0.0
          %2241 = vmatprep.subr.mxu0 0.0
          %2242 = vmatpush2.msra.mxu0 0.0
          %2243 = vmatprep.subr.mxu0 0.0
          %2244 = vmatpush2.msra.mxu0 0.0
          %2245 = vmatprep.subr.mxu0 0.0
          %2246 = vmatpush2.msra.mxu0 0.0
          %2247 = vmatprep.subr.mxu0 0.0
          %2248 = vmatpush2.msra.mxu0 0.0
          %2249 = vmatprep.subr.mxu0 0.0
          %2250 = vmatpush2.msra.mxu0 0.0
          %2251 = vmatprep.subr.mxu0 0.0
          %2252 = vmatpush2.msra.mxu0 0.0
          %2253 = vmatprep.subr.mxu0 0.0
          %2254 = vmatpush2.msra.mxu0 0.0
          %2255 = vmatprep.subr.mxu0 0.0
          %2256 = vmatpush2.msra.mxu0 0.0
          %2257 = vmatprep.subr.mxu0 0.0
          %2258 = vmatpush2.msra.mxu0 0.0
          %2259 = vmatprep.subr.mxu0 0.0
          %2260 = vmatpush2.msra.mxu0 0.0
          %2261 = vmatprep.subr.mxu0 0.0
          %2262 = vmatpush2.msra.mxu0 0.0
          %2263 = vmatprep.subr.mxu0 0.0
          %2264 = vmatpush2.msra.mxu0 0.0
          %2265 = vmatprep.subr.mxu0 0.0
          %2266 = vmatpush2.msra.mxu0 0.0
          %2267 = vmatprep.subr.mxu0 0.0
          %2268 = vmatpush2.msra.mxu0 0.0
          %2269 = vmatprep.subr.mxu0 0.0
          %2270 = vmatpush2.msra.mxu0 0.0
          %2271 = vmatprep.mubr.f32.mxu0 0.0
          %2272 = vmatmul.mubr.f32.gmra.mxu0 %v2205
          %v2273 = vpop.f32.mrf.mxu0
          %v2274 = vadd.f32 %v2202, %v2273
          %v2275 = vpop.f32.mrf.mxu0
          %2276 = vdwg.mxu0
          %vm2277 = vcmask 33792
          %2278 = vst.msk [vmem:[#allocation9] sm:$0x3] %vm2277, %v2274
        $region120: #{bert_regressor_forward.1} parent=99 // pred_fallthru
          _
        // Predicated region
        $region121: #{bert_regressor_forward.1} parent=99 // pred_check
          %p2279 = pneg %p531
        $region122: #{bert_regressor_forward.1} parent=99 // pred_check_branch
          %2281 = sbr.rel (%p2279) target = $region124
        $region123: #{bert_regressor_forward.1} parent=99 // pred_region
          %s2283 = ssub.s32 32, 32
          %2284 = vsyncadd [#allocation5], %s2283
          %s2286 = sshll.u32 [#allocation9], 4
          %s2287 = int_to_ptr.vmem [resolvable:$true] %s2286
          %2289 = dma.vmem_to_hbm [thread:$0]  %s2287, 32, %s20, [#allocation5]
        $region124: #{bert_regressor_forward.1} parent=99 // pred_fallthru
          _
        // Predicated region
        $region125: #{bert_regressor_forward.1} parent=99 // pred_check
          %p2290 = pneg %p531
        $region126: #{bert_regressor_forward.1} parent=99 // pred_check_branch
          %2292 = sbr.rel (%p2290) target = $region128
        $region127: #{bert_regressor_forward.1} parent=99 // pred_region
          %2293 = dma.done [#allocation5], 32
        $region128: #{bert_regressor_forward.1} parent=99 // pred_fallthru
          _
      $region100: #{bert_regressor_forward.1} parent=5 // pred_fallthru
        _
      %p2294 = scmp.le.s32.totalorder 2, %s33
      // Predicated region
      $region129: #{bert_regressor_forward.1} parent=5 // pred_check
        %p2295 = pneg %p2294
      $region130: #{bert_regressor_forward.1} parent=5 // pred_check_branch
        %2297 = sbr.rel (%p2295) target = $region132
      $region131: #{bert_regressor_forward.1} parent=5 // pred_region
        %s2298 = ssub.s32 %s33, 2
      $region132: #{bert_regressor_forward.1} parent=5 // pred_fallthru
        _
    $region6: #{bert_regressor_forward.1} parent=1 // loop_footer
      %s37 = sadd.s32 1, %s33
    $region7: #{bert_regressor_forward.1} parent=1 // loop_footer_branch
      %32 = sbr.rel target = $region3
    $region8: #{bert_regressor_forward.1} parent=1 // loop_exit
      _
    %2299 = vsyncpa [#allocation4], 1
    %s2300 = scalar_lea.sflag [#allocation4], 1
    %2301 = vsyncpa %s2300, 1
    %2302 = vsyncpa [#allocation7], 1
    %s2303 = scalar_lea.sflag [#allocation7], 1
    %2304 = vsyncpa %s2303, 1
    %2305 = vsyncpa [#allocation5], 1
    %s2306 = scalar_lea.sflag [#allocation5], 1
    %2307 = vsyncpa %s2306, 1

</llo_original>
